<compile_context>
chip_gen: v7x
topology: tpu7x:2x2x1
jax: 0.10.0
libtpu: 0.0.40
codegen_flags: <defaults>
</compile_context>

<pallas_src>
import math

import jax
import jax.numpy as jnp
import numpy as np
from jax import lax
from jax.experimental import pallas as pl
from jax.experimental.pallas import tpu as pltpu


def _cdiv(a, b):
    return -(-a // b)


def _round_up(a, b):
    return _cdiv(a, b) * b


# --------------------------------------------------------------------------- #
# Kernel: per-edge dense math + one-hot scatter + fused finalize
# --------------------------------------------------------------------------- #
def _edge_scatter_finalize_kernel(
    # per-edge tiles
    reltime_ref,   # (TE, in+time) bf16: [rel_emb | time_emb]
    hshqr_ref,     # (TE, 2*in)    bf16: [hs | h_qr]
    obj_ref,       # (TE, 1)       int32 (padded edges: -1)
    # fuse_mlp weights (bf16) / biases (f32)
    w_f1_ref, b_f1_ref, w_f2_ref, b_f2_ref,
    # fused shared-LHS weight (3*in, 2*in + in + attn), bf16
    w_big_ref,
    # biases / small vectors (f32)
    b_gate_ref, b_trans_ref, b_qr_ref, w_alpha_ref,
    # remaining gate weight (in, in) bf16 and output projection (in, out_pad) bf16
    wt_rh_ref, wh_ref,
    # output block (node_tile, out_pad) f32
    out_ref,
    # accumulator scratch (node_tile, 128) f32: [message | degree | pad]
    acc_ref,
):
    f32 = jnp.float32
    bf16 = jnp.bfloat16
    in_dim = w_f2_ref.shape[0]
    two_in = 2 * in_dim
    te = obj_ref.shape[0]
    nt = acc_ref.shape[0]
    acc_w = acc_ref.shape[1]

    def leaky(x):  # LeakyReLU, negative_slope=0.01
        return jnp.where(x > 0, x, 0.01 * x)

    def bdot(a, b):
        return jnp.dot(a, b, preferred_element_type=f32)

    reltime_bf = reltime_ref[...]
    hshqr_bf = hshqr_ref[...]

    # --- hr = fuse_mlp([rel_emb | time_emb]) + rel_emb (single K=in+time dot) --
    h1 = leaky(bdot(reltime_bf, w_f1_ref[...]) + b_f1_ref[...])
    h2 = leaky(bdot(h1.astype(bf16), w_f2_ref[...]) + b_f2_ref[...])
    hr = h2 + reltime_bf[:, :in_dim].astype(f32)

    # --- ONE fused shared-LHS projection: [hr | hs | h_qr] @ [gate|trans|attn] --
    lhs = jnp.concatenate([hr.astype(bf16), hshqr_bf], axis=1)      # (TE, 3*in)
    big = bdot(lhs, w_big_ref[...])                                 # (TE, 3*in+attn)

    # --- GRU-like gate ---------------------------------------------------------
    gate = jax.nn.sigmoid(big[:, :two_in] + b_gate_ref[...])
    update = gate[:, :in_dim]
    reset = gate[:, in_dim:two_in]

    hs_f = hshqr_bf[:, :in_dim].astype(f32)
    cand = jnp.tanh(big[:, two_in:two_in + in_dim]
                    + bdot((reset * hs_f).astype(bf16), wt_rh_ref[...])
                    + b_trans_ref[...])
    message = (1.0 - update) * hs_f + update * cand

    # --- sigmoid attention (VPU mul + lane reduce, no N=1 matmul) --------------
    att = leaky(big[:, two_in + in_dim:] + b_qr_ref[...])
    alpha = jax.nn.sigmoid(jnp.sum(att * w_alpha_ref[...], axis=-1, keepdims=True))
    up_msg = alpha * message                                        # (TE, in)

    # --- lane-dense augmented message: [msg | ones | zeros] (TE, 128) ----------
    parts = [up_msg, jnp.ones((te, 1), f32)]
    pad_w = acc_w - in_dim - 1
    if pad_w:
        parts.append(jnp.zeros((te, pad_w), f32))
    up_aug = jnp.concatenate(parts, axis=1).astype(bf16)

    # --- one-hot scatter over this node tile (MXU); degrees ride along ---------
    node_start = pl.program_id(0) * nt
    node_ids = node_start + lax.broadcasted_iota(jnp.int32, (1, nt), 1)
    onehot = (obj_ref[...] == node_ids).astype(bf16)                # (TE, nt)
    dnums = (((0,), (0,)), ((), ()))                                # contract edge axis
    contrib = lax.dot_general(onehot, up_aug, dnums,
                              preferred_element_type=f32)           # (nt, acc_w)

    t = pl.program_id(1)

    @pl.when(t == 0)
    def _():
        acc_ref[...] = contrib                                      # direct write

    @pl.when(t != 0)
    def _():
        acc_ref[...] += contrib

    # --- fused finalize on the last edge tile: degree norm + W_h ---------------
    @pl.when(t == pl.num_programs(1) - 1)
    def _():
        acc = acc_ref[...]
        msg = acc[:, :in_dim]
        deg = acc[:, in_dim:in_dim + 1]
        norm = msg * lax.rsqrt(deg + 0.0001)
        out_ref[...] = jnp.dot(norm.astype(wh_ref.dtype), wh_ref[...],
                               preferred_element_type=f32)          # lane-dense out


# --------------------------------------------------------------------------- #
# Parameters
# --------------------------------------------------------------------------- #
def make_time_pe(time_dim, max_length):
    pos = jnp.arange(0, max_length, dtype=jnp.float32)[:, None]
    div = jnp.exp(jnp.arange(0, time_dim, 2, dtype=jnp.float32)
                  * -(math.log(10000.0) / time_dim))
    pe = jnp.zeros((max_length, time_dim), jnp.float32)
    pe = pe.at[:, 0::2].set(jnp.sin(pos * div))
    pe = pe.at[:, 1::2].set(jnp.cos(pos * div))
    return pe


def init_params(key, in_dim, out_dim, attn_dim, n_rel, max_length):
    time_dim = in_dim // 4
    ks = iter(jax.random.split(key, 24))

    def lin(fan_in, fan_out):
        bound = 1.0 / math.sqrt(fan_in)
        return jax.random.uniform(next(ks), (fan_in, fan_out), jnp.float32, -bound, bound)

    def bias(fan_in, fan_out):
        bound = 1.0 / math.sqrt(fan_in)
        return jax.random.uniform(next(ks), (1, fan_out), jnp.float32, -bound, bound)

    p = {}
    p["rela_embed"] = 0.1 * jax.random.normal(next(ks), (2 * n_rel + 1, in_dim), jnp.float32)
    p["time_pe"] = make_time_pe(time_dim, max_length)
    # fuse_mlp: Linear(in+time -> in) + LeakyReLU + Linear(in -> in) + LeakyReLU
    p["w_fuse1"] = lin(in_dim + time_dim, in_dim)
    p["b_fuse1"] = bias(in_dim + time_dim, in_dim)
    p["w_fuse2"] = lin(in_dim, in_dim)
    p["b_fuse2"] = bias(in_dim, in_dim)
    # gate_W: Linear(3*in -> 2*in) + Sigmoid ; rows ordered [hr | h_qr | hs]
    p["w_gate"] = lin(3 * in_dim, 2 * in_dim)
    p["b_gate"] = bias(3 * in_dim, 2 * in_dim)
    # hidden_trans: Linear(2*in -> in) + Tanh ; rows ordered [hr | reset*hs]
    p["w_trans"] = lin(2 * in_dim, in_dim)
    p["b_trans"] = bias(2 * in_dim, in_dim)
    # attention
    p["w_s"] = lin(in_dim, attn_dim)        # Ws_attn (no bias)
    p["w_r"] = lin(in_dim, attn_dim)        # Wr_attn (no bias)
    p["w_qr"] = lin(in_dim, attn_dim)       # Wqr_attn (with bias)
    p["b_qr"] = bias(in_dim, attn_dim)
    p["w_alpha"] = lin(attn_dim, 1)         # w_alpha (no bias)
    # output projection (no bias), act = identity
    p["w_h"] = lin(in_dim, out_dim)
    return p


# --------------------------------------------------------------------------- #
# Wrapper: gathers (glue), weight fusion/padding, one pallas_call
# --------------------------------------------------------------------------- #
def timeline_gnn_layer5(q_sub, q_rel, hidden, edges, n_node, params,
                        *, edge_tile=512, node_tile=1024):
    del q_sub  # unused in the reference forward as well
    f32, bf16 = jnp.float32, jnp.bfloat16
    in_dim = hidden.shape[1]
    out_dim = params["w_h"].shape[1]
    attn_dim = params["w_s"].shape[1]
    time_dim = params["time_pe"].shape[1]
    E = edges.shape[0]

    # -- integer gathers (JAX glue); per-edge features packed into two streams --
    sub, rel, obj = edges[:, 4], edges[:, 2], edges[:, 5]
    r_idx, tim = edges[:, 0], edges[:, 6]
    reltime = jnp.concatenate([params["rela_embed"][rel],
                               params["time_pe"][tim]], axis=1)      # (E, in+time)
    hs_hqr = jnp.concatenate([hidden[sub],
                              params["rela_embed"][q_rel][r_idx]], axis=1)  # (E, 2*in)

    # -- edge tiling / padding (tile multiple of 16 for bf16 sublane packing) ---
    te = max(16, min(edge_tile, _round_up(E, 16)))
    te = _round_up(te, 16)
    tiles = _cdiv(E, te)
    e_pad = tiles * te
    pad = e_pad - E

    reltime = jnp.pad(reltime, ((0, pad), (0, 0))).astype(bf16)
    hs_hqr = jnp.pad(hs_hqr, ((0, pad), (0, 0))).astype(bf16)
    # padded edges get obj = -1 so their one-hot row (and degree) is all zeros
    obj2d = jnp.pad(obj.astype(jnp.int32), (0, pad), constant_values=-1).reshape(-1, 1)

    # -- node tiling (bounds one-hot + resident acc for v7x 64 MiB VMEM) --------
    n_pad = _round_up(max(n_node, 1), 128)
    nt = min(_round_up(node_tile, 128), n_pad)
    node_tiles = _cdiv(n_pad, nt)
    n_pad = node_tiles * nt

    out_pad = _round_up(out_dim, 128)           # lane-dense final output columns
    acc_w = _round_up(in_dim + 1, 128)          # lane-dense [message | degree | pad]

    # -- fused / padded weights -------------------------------------------------
    w_f1 = params["w_fuse1"].astype(bf16)       # (in+time, in), used whole
    b_f1 = params["b_fuse1"]
    w_f2 = params["w_fuse2"].astype(bf16)
    b_f2 = params["b_fuse2"]
    wg = params["w_gate"]                       # rows [hr | h_qr | hs], cols [update|reset]
    zeros_in = jnp.zeros((in_dim, in_dim), f32)
    # row blocks ordered to match in-kernel LHS [hr | hs | h_qr];
    # column blocks [gate (2*in) | trans (in) | attn (attn)]
    w_big = jnp.concatenate(
        [jnp.concatenate([wg[:in_dim], params["w_trans"][:in_dim], params["w_r"]], axis=1),
         jnp.concatenate([wg[2 * in_dim:3 * in_dim], zeros_in, params["w_s"]], axis=1),
         jnp.concatenate([wg[in_dim:2 * in_dim], zeros_in, params["w_qr"]], axis=1)],
        axis=0).astype(bf16)                    # (3*in, 2*in + in + attn)
    wt_rh = params["w_trans"][in_dim:].astype(bf16)
    b_gate = params["b_gate"]
    b_trans = params["b_trans"]
    b_qr = params["b_qr"]
    w_alpha_row = params["w_alpha"].T           # (1, attn)
    wh_pad = jnp.pad(params["w_h"], ((0, 0), (0, out_pad - out_dim))).astype(bf16)

    # -- pallas_call: (node_tiles, edge_tiles) grid, finalize fused in ----------
    def edge_spec(feat):
        return pl.BlockSpec((te, feat), lambda n, t: (t, 0))

    def const_spec(arr):
        return pl.BlockSpec(arr.shape, lambda n, t: (0, 0))

    operands = (reltime, hs_hqr, obj2d,
                w_f1, b_f1, w_f2, b_f2,
                w_big, b_gate, b_trans, b_qr, w_alpha_row,
                wt_rh, wh_pad)
    in_specs = ([edge_spec(in_dim + time_dim), edge_spec(2 * in_dim), edge_spec(1)]
                + [const_spec(a) for a in operands[3:]])

    out_full = pl.pallas_call(
        _edge_scatter_finalize_kernel,
        out_shape=jax.ShapeDtypeStruct((n_pad, out_pad), f32),
        grid=(node_tiles, tiles),
        in_specs=in_specs,
        out_specs=pl.BlockSpec((nt, out_pad), lambda n, t: (n, 0)),
        scratch_shapes=[pltpu.VMEM((nt, acc_w), f32)],
        compiler_params=pltpu.CompilerParams(
            dimension_semantics=("parallel", "arbitrary"),
            vmem_limit_bytes=48 * 1024 * 1024),   # safe on v7x (64 MiB) and below
    )(*operands)

    return out_full[:n_node, :out_dim]


# --------------------------------------------------------------------------- #
# Pure-JAX reference (f32) for verification
# --------------------------------------------------------------------------- #
def reference_forward(q_rel, hidden, edges, n_node, params):
    in_dim = hidden.shape[1]
    leaky = lambda x: jnp.where(x > 0, x, 0.01 * x)

    sub, rel, obj = edges[:, 4], edges[:, 2], edges[:, 5]
    r_idx, tim = edges[:, 0], edges[:, 6]
    rel_emb = params["rela_embed"][rel]
    time_emb = params["time_pe"][tim]
    comp = jnp.concatenate([rel_emb, time_emb], axis=1)
    h1 = leaky(comp @ params["w_fuse1"] + params["b_fuse1"])
    h2 = leaky(h1 @ params["w_fuse2"] + params["b_fuse2"])
    hr = h2 + rel_emb
    hs = hidden[sub]
    h_qr = params["rela_embed"][q_rel][r_idx]

    factors = jnp.concatenate([hr, h_qr, hs], axis=1)
    gate = jax.nn.sigmoid(factors @ params["w_gate"] + params["b_gate"])
    update, reset = gate[:, :in_dim], gate[:, in_dim:]
    cand = jnp.tanh(jnp.concatenate([hr, reset * hs], axis=1) @ params["w_trans"]
                    + params["b_trans"])
    message = (1.0 - update) * hs + update * cand

    att = leaky(hs @ params["w_s"] + hr @ params["w_r"]
                + h_qr @ params["w_qr"] + params["b_qr"])
    alpha = jax.nn.sigmoid(att @ params["w_alpha"])
    up_msg = alpha * message

    msg_agg = jnp.zeros((n_node, in_dim), jnp.float32).at[obj].add(up_msg)
    deg = jnp.zeros((n_node, 1), jnp.float32).at[obj].add(1.0)
    msg_agg = msg_agg / jnp.sqrt(deg + 0.0001)
    return msg_agg @ params["w_h"]


# --------------------------------------------------------------------------- #
if __name__ == "__main__":
    in_dim, out_dim, attn_dim = 32, 32, 16
    n_rel = 5
    max_history_length = 50
    n_node, E, n_query = 24, 200, 6

    key = jax.random.PRNGKey(0)
    kp, k1, k2, k3, k4, k5, k6, k7 = jax.random.split(key, 8)

    params = init_params(kp, in_dim, out_dim, attn_dim, n_rel, max_history_length)

    # edges columns: [0]=query idx, [1]=unused, [2]=rel, [3]=unused, [4]=sub, [5]=obj, [6]=time
    edges = jnp.stack(
        [
            jax.random.randint(k1, (E,), 0, n_query),
            jnp.zeros((E,), jnp.int32),
            jax.random.randint(k2, (E,), 0, 2 * n_rel + 1),
            jnp.zeros((E,), jnp.int32),
            jax.random.randint(k3, (E,), 0, n_node),
            jax.random.randint(k4, (E,), 0, n_node),
            jax.random.randint(k5, (E,), 0, max_history_length),
        ],
        axis=1,
    ).astype(jnp.int32)

    q_sub = jax.random.randint(k6, (n_query,), 0, n_node)
    q_rel = jax.random.randint(jax.random.fold_in(k6, 1), (n_query,), 0, 2 * n_rel + 1)
    hidden = 0.1 * jax.random.normal(k7, (n_node, in_dim), jnp.float32)

    # small edge_tile here so the multi-tile accumulation + fused finalize path
    # is exercised; production default is edge_tile=512.
    out = timeline_gnn_layer5(q_sub, q_rel, hidden, edges, n_node, params,
                              edge_tile=64)
    out = jax.block_until_ready(out)

    ref = jax.block_until_ready(reference_forward(q_rel, hidden, edges, n_node, params))
    # tolerance sized for bf16 MXU inputs (f32 accumulation / f32 gating math)
    np.testing.assert_allclose(np.asarray(out), np.asarray(ref), rtol=5e-2, atol=1e-2)

    print("KERNEL_OK")
</pallas_src>

<mosaic_0001>
module attributes {stable_mosaic.version = 11 : i64} {
  func.func @_edge_scatter_finalize_kernel(%arg0: i32, %arg1: i32, %arg2: memref<64x40xbf16, #tpu.memory_space<vmem>>, %arg3: memref<64x64xbf16, #tpu.memory_space<vmem>>, %arg4: memref<64x1xi32, #tpu.memory_space<vmem>>, %arg5: memref<40x32xbf16, #tpu.memory_space<vmem>>, %arg6: memref<1x32xf32, #tpu.memory_space<vmem>>, %arg7: memref<32x32xbf16, #tpu.memory_space<vmem>>, %arg8: memref<1x32xf32, #tpu.memory_space<vmem>>, %arg9: memref<96x112xbf16, #tpu.memory_space<vmem>>, %arg10: memref<1x64xf32, #tpu.memory_space<vmem>>, %arg11: memref<1x32xf32, #tpu.memory_space<vmem>>, %arg12: memref<1x16xf32, #tpu.memory_space<vmem>>, %arg13: memref<1x16xf32, #tpu.memory_space<vmem>>, %arg14: memref<32x32xbf16, #tpu.memory_space<vmem>>, %arg15: memref<32x128xbf16, #tpu.memory_space<vmem>>, %arg16: memref<128x128xf32, #tpu.memory_space<vmem>>, %arg17: memref<128x128xf32, #tpu.memory_space<vmem>>) attributes {dimension_semantics = [#tpu.dimension_semantics<parallel>, #tpu.dimension_semantics<arbitrary>], iteration_bounds = array<i64: 1, 4>, scalar_prefetch = 0 : i64, scratch_operands = 1 : i64, tpu.core_type = #tpu.core_type<tc>, window_params = [{transform_indices = @transform_0, window_bounds = array<i64: 64, 40>}, {transform_indices = @transform_1, window_bounds = array<i64: 64, 64>}, {transform_indices = @transform_2, window_bounds = array<i64: 64, 1>}, {pipeline_mode = #tpu.pipeline_mode<synchronous>, transform_indices = @transform_3, window_bounds = array<i64: 40, 32>}, {pipeline_mode = #tpu.pipeline_mode<synchronous>, transform_indices = @transform_4, window_bounds = array<i64: 1, 32>}, {pipeline_mode = #tpu.pipeline_mode<synchronous>, transform_indices = @transform_5, window_bounds = array<i64: 32, 32>}, {pipeline_mode = #tpu.pipeline_mode<synchronous>, transform_indices = @transform_6, window_bounds = array<i64: 1, 32>}, {pipeline_mode = #tpu.pipeline_mode<synchronous>, transform_indices = @transform_7, window_bounds = array<i64: 96, 112>}, {pipeline_mode = #tpu.pipeline_mode<synchronous>, transform_indices = @transform_8, window_bounds = array<i64: 1, 64>}, {pipeline_mode = #tpu.pipeline_mode<synchronous>, transform_indices = @transform_9, window_bounds = array<i64: 1, 32>}, {pipeline_mode = #tpu.pipeline_mode<synchronous>, transform_indices = @transform_10, window_bounds = array<i64: 1, 16>}, {pipeline_mode = #tpu.pipeline_mode<synchronous>, transform_indices = @transform_11, window_bounds = array<i64: 1, 16>}, {pipeline_mode = #tpu.pipeline_mode<synchronous>, transform_indices = @transform_12, window_bounds = array<i64: 32, 32>}, {pipeline_mode = #tpu.pipeline_mode<synchronous>, transform_indices = @transform_13, window_bounds = array<i64: 32, 128>}, {transform_indices = @transform_14, window_bounds = array<i64: 128, 128>}]} {
    %c0 = arith.constant 0 : index
    %c0_0 = arith.constant 0 : index
    %0 = vector.load %arg2[%c0, %c0_0] : memref<64x40xbf16, #tpu.memory_space<vmem>>, vector<64x40xbf16>
    %c0_1 = arith.constant 0 : index
    %c0_2 = arith.constant 0 : index
    %1 = vector.load %arg3[%c0_1, %c0_2] : memref<64x64xbf16, #tpu.memory_space<vmem>>, vector<64x64xbf16>
    %c0_3 = arith.constant 0 : index
    %c0_4 = arith.constant 0 : index
    %2 = vector.load %arg5[%c0_3, %c0_4] : memref<40x32xbf16, #tpu.memory_space<vmem>>, vector<40x32xbf16>
    %cst = arith.constant dense<0.000000e+00> : vector<64x32xf32>
    %3 = tpu.matmul %0, %2, %cst {dimension_numbers = #tpu.dot_dimension_numbers<[1], [0], [0], [1], [0, 0, 1, 1], [], []>} : vector<64x40xbf16>, vector<40x32xbf16>, vector<64x32xf32> -> vector<64x32xf32>
    %c0_5 = arith.constant 0 : index
    %c0_6 = arith.constant 0 : index
    %4 = vector.load %arg6[%c0_5, %c0_6] : memref<1x32xf32, #tpu.memory_space<vmem>>, vector<1x32xf32>
    %5 = vector.broadcast %4 : vector<1x32xf32> to vector<64x32xf32>
    %6 = arith.addf %3, %5 : vector<64x32xf32>
    %cst_7 = arith.constant 0.000000e+00 : f32
    %7 = vector.broadcast %cst_7 : f32 to vector<64x32xf32>
    %8 = arith.cmpf ogt, %6, %7 : vector<64x32xf32>
    %cst_8 = arith.constant 0.00999999977 : f32
    %9 = vector.broadcast %cst_8 : f32 to vector<64x32xf32>
    %10 = arith.mulf %9, %6 : vector<64x32xf32>
    %11 = arith.select %8, %6, %10 : vector<64x32xi1>, vector<64x32xf32>
    %12 = arith.truncf %11 : vector<64x32xf32> to vector<64x32xbf16>
    %c0_9 = arith.constant 0 : index
    %c0_10 = arith.constant 0 : index
    %13 = vector.load %arg7[%c0_9, %c0_10] : memref<32x32xbf16, #tpu.memory_space<vmem>>, vector<32x32xbf16>
    %cst_11 = arith.constant dense<0.000000e+00> : vector<64x32xf32>
    %14 = tpu.matmul %12, %13, %cst_11 {dimension_numbers = #tpu.dot_dimension_numbers<[1], [0], [0], [1], [0, 0, 1, 1], [], []>} : vector<64x32xbf16>, vector<32x32xbf16>, vector<64x32xf32> -> vector<64x32xf32>
    %c0_12 = arith.constant 0 : index
    %c0_13 = arith.constant 0 : index
    %15 = vector.load %arg8[%c0_12, %c0_13] : memref<1x32xf32, #tpu.memory_space<vmem>>, vector<1x32xf32>
    %16 = vector.broadcast %15 : vector<1x32xf32> to vector<64x32xf32>
    %17 = arith.addf %14, %16 : vector<64x32xf32>
    %cst_14 = arith.constant 0.000000e+00 : f32
    %18 = vector.broadcast %cst_14 : f32 to vector<64x32xf32>
    %19 = arith.cmpf ogt, %17, %18 : vector<64x32xf32>
    %cst_15 = arith.constant 0.00999999977 : f32
    %20 = vector.broadcast %cst_15 : f32 to vector<64x32xf32>
    %21 = arith.mulf %20, %17 : vector<64x32xf32>
    %22 = arith.select %19, %17, %21 : vector<64x32xi1>, vector<64x32xf32>
    %23 = vector.extract_strided_slice %0 {offsets = [0, 0], sizes = [64, 32], strides = [1, 1]} : vector<64x40xbf16> to vector<64x32xbf16>
    %24 = arith.extf %23 : vector<64x32xbf16> to vector<64x32xf32>
    %25 = arith.addf %22, %24 : vector<64x32xf32>
    %26 = arith.truncf %25 : vector<64x32xf32> to vector<64x32xbf16>
    %27 = tpu.concatenate %26, %1 in 1 : vector<64x32xbf16>, vector<64x64xbf16> -> vector<64x96xbf16>
    %c0_16 = arith.constant 0 : index
    %c0_17 = arith.constant 0 : index
    %28 = vector.load %arg9[%c0_16, %c0_17] : memref<96x112xbf16, #tpu.memory_space<vmem>>, vector<96x112xbf16>
    %cst_18 = arith.constant dense<0.000000e+00> : vector<64x112xf32>
    %29 = tpu.matmul %27, %28, %cst_18 {dimension_numbers = #tpu.dot_dimension_numbers<[1], [0], [0], [1], [0, 0, 1, 1], [], []>} : vector<64x96xbf16>, vector<96x112xbf16>, vector<64x112xf32> -> vector<64x112xf32>
    %30 = vector.extract_strided_slice %29 {offsets = [0, 0], sizes = [64, 64], strides = [1, 1]} : vector<64x112xf32> to vector<64x64xf32>
    %c0_19 = arith.constant 0 : index
    %c0_20 = arith.constant 0 : index
    %31 = vector.load %arg10[%c0_19, %c0_20] : memref<1x64xf32, #tpu.memory_space<vmem>>, vector<1x64xf32>
    %32 = vector.broadcast %31 : vector<1x64xf32> to vector<64x64xf32>
    %33 = arith.addf %30, %32 : vector<64x64xf32>
    %34 = arith.negf %33 : vector<64x64xf32>
    %35 = math.exp %34 : vector<64x64xf32>
    %cst_21 = arith.constant 1.000000e+00 : f32
    %36 = vector.broadcast %cst_21 : f32 to vector<64x64xf32>
    %37 = arith.addf %36, %35 : vector<64x64xf32>
    %38 = arith.divf %36, %37 : vector<64x64xf32>
    %39 = vector.extract_strided_slice %38 {offsets = [0, 0], sizes = [64, 32], strides = [1, 1]} : vector<64x64xf32> to vector<64x32xf32>
    %40 = vector.extract_strided_slice %38 {offsets = [0, 32], sizes = [64, 32], strides = [1, 1]} : vector<64x64xf32> to vector<64x32xf32>
    %41 = vector.extract_strided_slice %1 {offsets = [0, 0], sizes = [64, 32], strides = [1, 1]} : vector<64x64xbf16> to vector<64x32xbf16>
    %42 = arith.extf %41 : vector<64x32xbf16> to vector<64x32xf32>
    %43 = vector.extract_strided_slice %29 {offsets = [0, 64], sizes = [64, 32], strides = [1, 1]} : vector<64x112xf32> to vector<64x32xf32>
    %44 = arith.mulf %40, %42 : vector<64x32xf32>
    %45 = arith.truncf %44 : vector<64x32xf32> to vector<64x32xbf16>
    %c0_22 = arith.constant 0 : index
    %c0_23 = arith.constant 0 : index
    %46 = vector.load %arg14[%c0_22, %c0_23] : memref<32x32xbf16, #tpu.memory_space<vmem>>, vector<32x32xbf16>
    %cst_24 = arith.constant dense<0.000000e+00> : vector<64x32xf32>
    %47 = tpu.matmul %45, %46, %cst_24 {dimension_numbers = #tpu.dot_dimension_numbers<[1], [0], [0], [1], [0, 0, 1, 1], [], []>} : vector<64x32xbf16>, vector<32x32xbf16>, vector<64x32xf32> -> vector<64x32xf32>
    %48 = arith.addf %43, %47 : vector<64x32xf32>
    %c0_25 = arith.constant 0 : index
    %c0_26 = arith.constant 0 : index
    %49 = vector.load %arg11[%c0_25, %c0_26] : memref<1x32xf32, #tpu.memory_space<vmem>>, vector<1x32xf32>
    %50 = vector.broadcast %49 : vector<1x32xf32> to vector<64x32xf32>
    %51 = arith.addf %48, %50 : vector<64x32xf32>
    %52 = math.tanh %51 : vector<64x32xf32>
    %cst_27 = arith.constant 1.000000e+00 : f32
    %53 = vector.broadcast %cst_27 : f32 to vector<64x32xf32>
    %54 = arith.subf %53, %39 : vector<64x32xf32>
    %55 = arith.mulf %54, %42 : vector<64x32xf32>
    %56 = arith.mulf %39, %52 : vector<64x32xf32>
    %57 = arith.addf %55, %56 : vector<64x32xf32>
    %58 = vector.extract_strided_slice %29 {offsets = [0, 96], sizes = [64, 16], strides = [1, 1]} : vector<64x112xf32> to vector<64x16xf32>
    %c0_28 = arith.constant 0 : index
    %c0_29 = arith.constant 0 : index
    %59 = vector.load %arg12[%c0_28, %c0_29] : memref<1x16xf32, #tpu.memory_space<vmem>>, vector<1x16xf32>
    %60 = vector.broadcast %59 : vector<1x16xf32> to vector<64x16xf32>
    %61 = arith.addf %58, %60 : vector<64x16xf32>
    %cst_30 = arith.constant 0.000000e+00 : f32
    %62 = vector.broadcast %cst_30 : f32 to vector<64x16xf32>
    %63 = arith.cmpf ogt, %61, %62 : vector<64x16xf32>
    %cst_31 = arith.constant 0.00999999977 : f32
    %64 = vector.broadcast %cst_31 : f32 to vector<64x16xf32>
    %65 = arith.mulf %64, %61 : vector<64x16xf32>
    %66 = arith.select %63, %61, %65 : vector<64x16xi1>, vector<64x16xf32>
    %c0_32 = arith.constant 0 : index
    %c0_33 = arith.constant 0 : index
    %67 = vector.load %arg13[%c0_32, %c0_33] : memref<1x16xf32, #tpu.memory_space<vmem>>, vector<1x16xf32>
    %68 = vector.broadcast %67 : vector<1x16xf32> to vector<64x16xf32>
    %69 = arith.mulf %66, %68 : vector<64x16xf32>
    %cst_34 = arith.constant dense<0.000000e+00> : vector<64xf32>
    %70 = vector.multi_reduction <add>, %69, %cst_34 [1] : vector<64x16xf32> to vector<64xf32>
    %71 = vector.shape_cast %70 : vector<64xf32> to vector<64x1xf32>
    %72 = arith.negf %71 : vector<64x1xf32>
    %73 = math.exp %72 : vector<64x1xf32>
    %cst_35 = arith.constant 1.000000e+00 : f32
    %74 = vector.broadcast %cst_35 : f32 to vector<64x1xf32>
    %75 = arith.addf %74, %73 : vector<64x1xf32>
    %76 = arith.divf %74, %75 : vector<64x1xf32>
    %77 = vector.broadcast %76 : vector<64x1xf32> to vector<64x32xf32>
    %78 = arith.mulf %77, %57 : vector<64x32xf32>
    %cst_36 = arith.constant 1.000000e+00 : f32
    %79 = vector.broadcast %cst_36 : f32 to vector<64x1xf32>
    %cst_37 = arith.constant 0.000000e+00 : f32
    %80 = vector.broadcast %cst_37 : f32 to vector<64x95xf32>
    %81 = tpu.concatenate %78, %79, %80 in 1 : vector<64x32xf32>, vector<64x1xf32>, vector<64x95xf32> -> vector<64x128xf32>
    %82 = arith.truncf %81 : vector<64x128xf32> to vector<64x128xbf16>
    %c128_i32 = arith.constant 128 : i32
    %83 = arith.muli %arg0, %c128_i32 : i32
    %84 = tpu.iota {dimensions = array<i32: 1>} : vector<1x128xi32>
    %85 = vector.broadcast %83 : i32 to vector<1x128xi32>
    %86 = arith.addi %85, %84 : vector<1x128xi32>
    %c0_38 = arith.constant 0 : index
    %c0_39 = arith.constant 0 : index
    %87 = vector.load %arg4[%c0_38, %c0_39] : memref<64x1xi32, #tpu.memory_space<vmem>>, vector<64x1xi32>
    %88 = vector.broadcast %87 : vector<64x1xi32> to vector<64x128xi32>
    %89 = vector.broadcast %86 : vector<1x128xi32> to vector<64x128xi32>
    %90 = arith.cmpi eq, %88, %89 : vector<64x128xi32>
    %91 = arith.extui %90 : vector<64x128xi1> to vector<64x128xi32>
    %92 = arith.sitofp %91 : vector<64x128xi32> to vector<64x128xf32>
    %93 = arith.truncf %92 : vector<64x128xf32> to vector<64x128xbf16>
    %cst_40 = arith.constant dense<0.000000e+00> : vector<128x128xf32>
    %94 = tpu.matmul %93, %82, %cst_40 {dimension_numbers = #tpu.dot_dimension_numbers<[0], [0], [1], [1], [0, 1, 1, 1], [], []>} : vector<64x128xbf16>, vector<64x128xbf16>, vector<128x128xf32> -> vector<128x128xf32>
    %c0_i32 = arith.constant 0 : i32
    %95 = arith.cmpi eq, %arg1, %c0_i32 : i32
    %96 = arith.extui %95 : i1 to i32
    %c0_i32_41 = arith.constant 0 : i32
    %97 = arith.cmpi ne, %96, %c0_i32_41 : i32
    scf.if %97 {
      %c0_45 = arith.constant 0 : index
      %c0_46 = arith.constant 0 : index
      %104 = vector.load %arg17[%c0_45, %c0_46] : memref<128x128xf32, #tpu.memory_space<vmem>>, vector<128x128xf32>
      tpu.vector_store %arg17[%c0_45, %c0_46], %94 {strides = array<i32>} : memref<128x128xf32, #tpu.memory_space<vmem>>, vector<128x128xf32>,
    } else {
    }
    %c0_i32_42 = arith.constant 0 : i32
    %98 = arith.cmpi ne, %arg1, %c0_i32_42 : i32
    %99 = arith.extui %98 : i1 to i32
    %c0_i32_43 = arith.constant 0 : i32
    %100 = arith.cmpi ne, %99, %c0_i32_43 : i32
    scf.if %100 {
      %c0_45 = arith.constant 0 : index
      %c0_46 = arith.constant 0 : index
      %104 = vector.load %arg17[%c0_45, %c0_46] : memref<128x128xf32, #tpu.memory_space<vmem>>, vector<128x128xf32>
      %105 = arith.addf %104, %94 : vector<128x128xf32>
      %c0_47 = arith.constant 0 : index
      %c0_48 = arith.constant 0 : index
      %106 = vector.load %arg17[%c0_47, %c0_48] : memref<128x128xf32, #tpu.memory_space<vmem>>, vector<128x128xf32>
      tpu.vector_store %arg17[%c0_47, %c0_48], %105 {strides = array<i32>} : memref<128x128xf32, #tpu.memory_space<vmem>>, vector<128x128xf32>,
    } else {
    }
    %c3_i32 = arith.constant 3 : i32
    %101 = arith.cmpi eq, %arg1, %c3_i32 : i32
    %102 = arith.extui %101 : i1 to i32
    %c0_i32_44 = arith.constant 0 : i32
    %103 = arith.cmpi ne, %102, %c0_i32_44 : i32
    scf.if %103 {
      %c0_45 = arith.constant 0 : index
      %c0_46 = arith.constant 0 : index
      %104 = vector.load %arg17[%c0_45, %c0_46] : memref<128x128xf32, #tpu.memory_space<vmem>>, vector<128x128xf32>
      %105 = vector.extract_strided_slice %104 {offsets = [0, 0], sizes = [128, 32], strides = [1, 1]} : vector<128x128xf32> to vector<128x32xf32>
      %106 = vector.extract_strided_slice %104 {offsets = [0, 32], sizes = [128, 1], strides = [1, 1]} : vector<128x128xf32> to vector<128x1xf32>
      %cst_47 = arith.constant 9.99999974E-5 : f32
      %107 = vector.broadcast %cst_47 : f32 to vector<128x1xf32>
      %108 = arith.addf %106, %107 : vector<128x1xf32>
      %109 = math.rsqrt %108 : vector<128x1xf32>
      %110 = vector.broadcast %109 : vector<128x1xf32> to vector<128x32xf32>
      %111 = arith.mulf %105, %110 : vector<128x32xf32>
      %112 = arith.truncf %111 : vector<128x32xf32> to vector<128x32xbf16>
      %c0_48 = arith.constant 0 : index
      %c0_49 = arith.constant 0 : index
      %113 = vector.load %arg15[%c0_48, %c0_49] : memref<32x128xbf16, #tpu.memory_space<vmem>>, vector<32x128xbf16>
      %cst_50 = arith.constant dense<0.000000e+00> : vector<128x128xf32>
      %114 = tpu.matmul %112, %113, %cst_50 {dimension_numbers = #tpu.dot_dimension_numbers<[1], [0], [0], [1], [0, 0, 1, 1], [], []>} : vector<128x32xbf16>, vector<32x128xbf16>, vector<128x128xf32> -> vector<128x128xf32>
      %c0_51 = arith.constant 0 : index
      %c0_52 = arith.constant 0 : index
      %115 = vector.load %arg16[%c0_51, %c0_52] : memref<128x128xf32, #tpu.memory_space<vmem>>, vector<128x128xf32>
      tpu.vector_store %arg16[%c0_51, %c0_52], %114 {strides = array<i32>} : memref<128x128xf32, #tpu.memory_space<vmem>>, vector<128x128xf32>,
    } else {
    }
    return
  }
  func.func @transform_0(%arg0: i32, %arg1: i32) -> (i32, i32) {
    %c0_i32 = arith.constant 0 : i32
    %c0_i32_0 = arith.constant 0 : i32
    return %arg1, %c0_i32 : i32, i32
  }
  func.func @transform_1(%arg0: i32, %arg1: i32) -> (i32, i32) {
    %c0_i32 = arith.constant 0 : i32
    %c0_i32_0 = arith.constant 0 : i32
    return %arg1, %c0_i32 : i32, i32
  }
  func.func @transform_2(%arg0: i32, %arg1: i32) -> (i32, i32) {
    %c0_i32 = arith.constant 0 : i32
    %c0_i32_0 = arith.constant 0 : i32
    return %arg1, %c0_i32 : i32, i32
  }
  func.func @transform_3(%arg0: i32, %arg1: i32) -> (i32, i32) {
    %c0_i32 = arith.constant 0 : i32
    %c0_i32_0 = arith.constant 0 : i32
    %c0_i32_1 = arith.constant 0 : i32
    return %c0_i32, %c0_i32_0 : i32, i32
  }
  func.func @transform_4(%arg0: i32, %arg1: i32) -> (i32, i32) {
    %c0_i32 = arith.constant 0 : i32
    %c0_i32_0 = arith.constant 0 : i32
    %c0_i32_1 = arith.constant 0 : i32
    return %c0_i32, %c0_i32_0 : i32, i32
  }
  func.func @transform_5(%arg0: i32, %arg1: i32) -> (i32, i32) {
    %c0_i32 = arith.constant 0 : i32
    %c0_i32_0 = arith.constant 0 : i32
    %c0_i32_1 = arith.constant 0 : i32
    return %c0_i32, %c0_i32_0 : i32, i32
  }
  func.func @transform_6(%arg0: i32, %arg1: i32) -> (i32, i32) {
    %c0_i32 = arith.constant 0 : i32
    %c0_i32_0 = arith.constant 0 : i32
    %c0_i32_1 = arith.constant 0 : i32
    return %c0_i32, %c0_i32_0 : i32, i32
  }
  func.func @transform_7(%arg0: i32, %arg1: i32) -> (i32, i32) {
    %c0_i32 = arith.constant 0 : i32
    %c0_i32_0 = arith.constant 0 : i32
    %c0_i32_1 = arith.constant 0 : i32
    return %c0_i32, %c0_i32_0 : i32, i32
  }
  func.func @transform_8(%arg0: i32, %arg1: i32) -> (i32, i32) {
    %c0_i32 = arith.constant 0 : i32
    %c0_i32_0 = arith.constant 0 : i32
    %c0_i32_1 = arith.constant 0 : i32
    return %c0_i32, %c0_i32_0 : i32, i32
  }
  func.func @transform_9(%arg0: i32, %arg1: i32) -> (i32, i32) {
    %c0_i32 = arith.constant 0 : i32
    %c0_i32_0 = arith.constant 0 : i32
    %c0_i32_1 = arith.constant 0 : i32
    return %c0_i32, %c0_i32_0 : i32, i32
  }
  func.func @transform_10(%arg0: i32, %arg1: i32) -> (i32, i32) {
    %c0_i32 = arith.constant 0 : i32
    %c0_i32_0 = arith.constant 0 : i32
    %c0_i32_1 = arith.constant 0 : i32
    return %c0_i32, %c0_i32_0 : i32, i32
  }
  func.func @transform_11(%arg0: i32, %arg1: i32) -> (i32, i32) {
    %c0_i32 = arith.constant 0 : i32
    %c0_i32_0 = arith.constant 0 : i32
    %c0_i32_1 = arith.constant 0 : i32
    return %c0_i32, %c0_i32_0 : i32, i32
  }
  func.func @transform_12(%arg0: i32, %arg1: i32) -> (i32, i32) {
    %c0_i32 = arith.constant 0 : i32
    %c0_i32_0 = arith.constant 0 : i32
    %c0_i32_1 = arith.constant 0 : i32
    return %c0_i32, %c0_i32_0 : i32, i32
  }
  func.func @transform_13(%arg0: i32, %arg1: i32) -> (i32, i32) {
    %c0_i32 = arith.constant 0 : i32
    %c0_i32_0 = arith.constant 0 : i32
    %c0_i32_1 = arith.constant 0 : i32
    return %c0_i32, %c0_i32_0 : i32, i32
  }
  func.func @transform_14(%arg0: i32, %arg1: i32) -> (i32, i32) {
    %c0_i32 = arith.constant 0 : i32
    %c0_i32_0 = arith.constant 0 : i32
    return %arg0, %c0_i32 : i32, i32
  }
}

</mosaic_0001>

<llo_original>
// kernel: tpu_custom_call.1
$region0: #{tpu_custom_call.1}
  #allocation0 [shape = 'u32[]', space=smem, size = 0x4, offset = 0x4, fixed_abs, tag = 'smem constant byte address 0x4 - core index']
  #allocation1 [shape = 'u32[144,128]{1,0:T(1,128)}', space=vmem, size = 0x12000, scoped, tag = 'internal scratch']
  #allocation2 [shape = 'f32[128,128]{1,0:T(8,128)}', space=vmem, size = 0x10000, scoped, tag = 'scratch operand']
  %s0 = inlined_call_operand.vmem [shape: bf16[256,40], index: 0, kind: input, shape index: {}]
  %s1 = inlined_call_operand.vmem [shape: bf16[256,64], index: 1, kind: input, shape index: {}]
  %s2 = inlined_call_operand.vmem [shape: s32[256,1], index: 2, kind: input, shape index: {}]
  %s3 = inlined_call_operand.vmem [shape: bf16[40,32], index: 3, kind: input, shape index: {}]
  %s4 = inlined_call_operand.vmem [shape: f32[1,32], index: 4, kind: input, shape index: {}]
  %s5 = inlined_call_operand.vmem [shape: bf16[32,32], index: 5, kind: input, shape index: {}]
  %s6 = inlined_call_operand.vmem [shape: f32[1,32], index: 6, kind: input, shape index: {}]
  %s7 = inlined_call_operand.vmem [shape: bf16[96,112], index: 7, kind: input, shape index: {}]
  %s8 = inlined_call_operand.vmem [shape: f32[1,64], index: 8, kind: input, shape index: {}]
  %s9 = inlined_call_operand.vmem [shape: f32[1,32], index: 9, kind: input, shape index: {}]
  %s10 = inlined_call_operand.vmem [shape: f32[1,16], index: 10, kind: input, shape index: {}]
  %s11 = inlined_call_operand.vmem [shape: f32[1,16], index: 11, kind: input, shape index: {}]
  %s12 = inlined_call_operand.vmem [shape: bf16[32,32], index: 12, kind: input, shape index: {}]
  %s13 = inlined_call_operand.vmem [shape: bf16[32,128], index: 13, kind: input, shape index: {}]
  %s14 = inlined_call_operand.hbm [shape: f32[128,128], index: 14, kind: output, shape index: {}]
  %s15 = sld [smem:[#allocation0]]
  $region101: #{tpu_custom_call.1} parent=0
    _
  %s17 = ssub.s32 1, %s15
  %s18 = scalar_select 0, %s17, %s15
  $region1: #{tpu_custom_call.1} parent=0
    #allocation3 [shape = 'u8[65536]{0}', space=vmem, size = 0x10000, scoped, tag = 'output window, operand 0, single buffered']
    #allocation4 [shape = 's32[2]{0}', space=sflag, size = 0x8, scoped, tag = 'scoped memory for tpu_custom_call.1']
    %19 = vsyncpa [#allocation4], 0
    loop: start=0, step=1, limit=6
    $region2: #{tpu_custom_call.1} parent=1 // loop_pre_header
      _
    $region3: #{tpu_custom_call.1} parent=1 // loop_header
      %s21 = sphi 0, %s25
      %p22 = scmp.ge.s32.totalorder %s21, 6
      %s28 = sphi 0, %s40
      %s29 = sphi 0, %s36
      %s30 = sphi 0, %s28
      %s31 = sphi 0, %s29
      %s32 = sphi 0, %s30
      %s33 = sphi 0, %s31
      %s43 = sphi 0, %s45
      %s46 = sphi 0, %s43
      %s47 = sphi 0, %s46
      %s63 = sphi 0, %s47
      %s69 = sphi 0, %s71
      %s72 = sphi 0, %s69
      %s73 = sphi 0, %s72
      %s89 = sphi 0, %s73
      %s95 = sphi 0, %s97
      %s98 = sphi 0, %s95
      %s99 = sphi 0, %s98
      %s115 = sphi 0, %s99
      %s119 = sphi 0, %s119
      %s121 = sphi 0, %s119
      %s122 = sphi 0, %s121
      %s136 = sphi 0, %s122
      %s140 = sphi 0, %s140
      %s142 = sphi 0, %s140
      %s143 = sphi 0, %s142
      %s157 = sphi 0, %s143
      %s161 = sphi 0, %s161
      %s163 = sphi 0, %s161
      %s164 = sphi 0, %s163
      %s178 = sphi 0, %s164
      %s182 = sphi 0, %s182
      %s184 = sphi 0, %s182
      %s185 = sphi 0, %s184
      %s199 = sphi 0, %s185
      %s203 = sphi 0, %s203
      %s205 = sphi 0, %s203
      %s206 = sphi 0, %s205
      %s220 = sphi 0, %s206
      %s224 = sphi 0, %s224
      %s226 = sphi 0, %s224
      %s227 = sphi 0, %s226
      %s241 = sphi 0, %s227
      %s245 = sphi 0, %s245
      %s247 = sphi 0, %s245
      %s248 = sphi 0, %s247
      %s262 = sphi 0, %s248
      %s266 = sphi 0, %s266
      %s268 = sphi 0, %s266
      %s269 = sphi 0, %s268
      %s283 = sphi 0, %s269
      %s287 = sphi 0, %s287
      %s289 = sphi 0, %s287
      %s290 = sphi 0, %s289
      %s304 = sphi 0, %s290
      %s308 = sphi 0, %s308
      %s310 = sphi 0, %s308
      %s311 = sphi 0, %s310
      %s325 = sphi 0, %s311
      %s329 = sphi 0, %s329
      %s331 = sphi 0, %s329
      %s332 = sphi 0, %s331
      %s346 = sphi 0, %s332
      %s352 = sphi 0, %s354
      %s355 = sphi 0, %s352
      %s356 = sphi 0, %s355
      %s372 = sphi 0, %s356
    $region4: #{tpu_custom_call.1} parent=1 // loop_header_branch
      %24 = sbr.rel (%p22) target = $region8
    $region5: #{tpu_custom_call.1} parent=1 // loop_body
      %s26 = ssub.s32 %s21, 1
      %s27 = ssub.s32 %s21, 2
      %s34 = sadd.s32 1, %s29
      %p35 = scmp.ge.s32.totalorder %s34, 4
      %s36 = scalar_select %p35, 0, %s34
      %s37 = sadd.s32 1, %s28
      %s38 = scalar_select %p35, %s37, %s28
      %p39 = scmp.ge.s32.totalorder %s38, 1
      %s40 = scalar_select %p39, 0, %s38
      %s41 = ssub.s32 %s29, %s36
      %p42 = scmp.eq.s32.totalorder %s41, 0
      %s44 = sadd.s32 %s43, 1
      %s45 = scalar_select %p42, %s43, %s44
      %p48 = pneg %p42
      %p49 = scmp.eq.s32.totalorder %s21, 3
      %p50 = por %p48, %p49
      %p51 = scmp.ne.s32.totalorder %s43, %s46
      %p52 = scmp.eq.s32.totalorder %s21, 0
      %p53 = por %p51, %p52
      %p54 = scmp.ne.s32.totalorder %s43, %s46
      %p55 = scmp.eq.s32.totalorder %s26, 3
      %p56 = por %p54, %p55
      %p57 = scmp.ne.s32.totalorder %s46, %s47
      %p58 = scmp.eq.s32.totalorder %s26, 0
      %p59 = por %p57, %p58
      %p60 = scmp.ne.s32.totalorder %s46, %s47
      %p61 = scmp.eq.s32.totalorder %s27, 3
      %p62 = por %p60, %p61
      %p64 = scmp.ne.s32.totalorder %s47, %s63
      %p65 = scmp.eq.s32.totalorder %s27, 0
      %p66 = por %p64, %p65
      %s67 = ssub.s32 %s29, %s36
      %p68 = scmp.eq.s32.totalorder %s67, 0
      %s70 = sadd.s32 %s69, 1
      %s71 = scalar_select %p68, %s69, %s70
      %p74 = pneg %p68
      %p75 = scmp.eq.s32.totalorder %s21, 3
      %p76 = por %p74, %p75
      %p77 = scmp.ne.s32.totalorder %s69, %s72
      %p78 = scmp.eq.s32.totalorder %s21, 0
      %p79 = por %p77, %p78
      %p80 = scmp.ne.s32.totalorder %s69, %s72
      %p81 = scmp.eq.s32.totalorder %s26, 3
      %p82 = por %p80, %p81
      %p83 = scmp.ne.s32.totalorder %s72, %s73
      %p84 = scmp.eq.s32.totalorder %s26, 0
      %p85 = por %p83, %p84
      %p86 = scmp.ne.s32.totalorder %s72, %s73
      %p87 = scmp.eq.s32.totalorder %s27, 3
      %p88 = por %p86, %p87
      %p90 = scmp.ne.s32.totalorder %s73, %s89
      %p91 = scmp.eq.s32.totalorder %s27, 0
      %p92 = por %p90, %p91
      %s93 = ssub.s32 %s29, %s36
      %p94 = scmp.eq.s32.totalorder %s93, 0
      %s96 = sadd.s32 %s95, 1
      %s97 = scalar_select %p94, %s95, %s96
      %p100 = pneg %p94
      %p101 = scmp.eq.s32.totalorder %s21, 3
      %p102 = por %p100, %p101
      %p103 = scmp.ne.s32.totalorder %s95, %s98
      %p104 = scmp.eq.s32.totalorder %s21, 0
      %p105 = por %p103, %p104
      %p106 = scmp.ne.s32.totalorder %s95, %s98
      %p107 = scmp.eq.s32.totalorder %s26, 3
      %p108 = por %p106, %p107
      %p109 = scmp.ne.s32.totalorder %s98, %s99
      %p110 = scmp.eq.s32.totalorder %s26, 0
      %p111 = por %p109, %p110
      %p112 = scmp.ne.s32.totalorder %s98, %s99
      %p113 = scmp.eq.s32.totalorder %s27, 3
      %p114 = por %p112, %p113
      %p116 = scmp.ne.s32.totalorder %s99, %s115
      %p117 = scmp.eq.s32.totalorder %s27, 0
      %p118 = por %p116, %p117
      %s120 = sadd.s32 %s119, 1
      %p123 = scmp.eq.s32.totalorder %s21, 3
      %p124 = scmp.ne.s32.totalorder %s119, %s121
      %p125 = scmp.eq.s32.totalorder %s21, 0
      %p126 = por %p124, %p125
      %p127 = scmp.ne.s32.totalorder %s119, %s121
      %p128 = scmp.eq.s32.totalorder %s26, 3
      %p129 = por %p127, %p128
      %p130 = scmp.ne.s32.totalorder %s121, %s122
      %p131 = scmp.eq.s32.totalorder %s26, 0
      %p132 = por %p130, %p131
      %p133 = scmp.ne.s32.totalorder %s121, %s122
      %p134 = scmp.eq.s32.totalorder %s27, 3
      %p135 = por %p133, %p134
      %p137 = scmp.ne.s32.totalorder %s122, %s136
      %p138 = scmp.eq.s32.totalorder %s27, 0
      %p139 = por %p137, %p138
      %s141 = sadd.s32 %s140, 1
      %p144 = scmp.eq.s32.totalorder %s21, 3
      %p145 = scmp.ne.s32.totalorder %s140, %s142
      %p146 = scmp.eq.s32.totalorder %s21, 0
      %p147 = por %p145, %p146
      %p148 = scmp.ne.s32.totalorder %s140, %s142
      %p149 = scmp.eq.s32.totalorder %s26, 3
      %p150 = por %p148, %p149
      %p151 = scmp.ne.s32.totalorder %s142, %s143
      %p152 = scmp.eq.s32.totalorder %s26, 0
      %p153 = por %p151, %p152
      %p154 = scmp.ne.s32.totalorder %s142, %s143
      %p155 = scmp.eq.s32.totalorder %s27, 3
      %p156 = por %p154, %p155
      %p158 = scmp.ne.s32.totalorder %s143, %s157
      %p159 = scmp.eq.s32.totalorder %s27, 0
      %p160 = por %p158, %p159
      %s162 = sadd.s32 %s161, 1
      %p165 = scmp.eq.s32.totalorder %s21, 3
      %p166 = scmp.ne.s32.totalorder %s161, %s163
      %p167 = scmp.eq.s32.totalorder %s21, 0
      %p168 = por %p166, %p167
      %p169 = scmp.ne.s32.totalorder %s161, %s163
      %p170 = scmp.eq.s32.totalorder %s26, 3
      %p171 = por %p169, %p170
      %p172 = scmp.ne.s32.totalorder %s163, %s164
      %p173 = scmp.eq.s32.totalorder %s26, 0
      %p174 = por %p172, %p173
      %p175 = scmp.ne.s32.totalorder %s163, %s164
      %p176 = scmp.eq.s32.totalorder %s27, 3
      %p177 = por %p175, %p176
      %p179 = scmp.ne.s32.totalorder %s164, %s178
      %p180 = scmp.eq.s32.totalorder %s27, 0
      %p181 = por %p179, %p180
      %s183 = sadd.s32 %s182, 1
      %p186 = scmp.eq.s32.totalorder %s21, 3
      %p187 = scmp.ne.s32.totalorder %s182, %s184
      %p188 = scmp.eq.s32.totalorder %s21, 0
      %p189 = por %p187, %p188
      %p190 = scmp.ne.s32.totalorder %s182, %s184
      %p191 = scmp.eq.s32.totalorder %s26, 3
      %p192 = por %p190, %p191
      %p193 = scmp.ne.s32.totalorder %s184, %s185
      %p194 = scmp.eq.s32.totalorder %s26, 0
      %p195 = por %p193, %p194
      %p196 = scmp.ne.s32.totalorder %s184, %s185
      %p197 = scmp.eq.s32.totalorder %s27, 3
      %p198 = por %p196, %p197
      %p200 = scmp.ne.s32.totalorder %s185, %s199
      %p201 = scmp.eq.s32.totalorder %s27, 0
      %p202 = por %p200, %p201
      %s204 = sadd.s32 %s203, 1
      %p207 = scmp.eq.s32.totalorder %s21, 3
      %p208 = scmp.ne.s32.totalorder %s203, %s205
      %p209 = scmp.eq.s32.totalorder %s21, 0
      %p210 = por %p208, %p209
      %p211 = scmp.ne.s32.totalorder %s203, %s205
      %p212 = scmp.eq.s32.totalorder %s26, 3
      %p213 = por %p211, %p212
      %p214 = scmp.ne.s32.totalorder %s205, %s206
      %p215 = scmp.eq.s32.totalorder %s26, 0
      %p216 = por %p214, %p215
      %p217 = scmp.ne.s32.totalorder %s205, %s206
      %p218 = scmp.eq.s32.totalorder %s27, 3
      %p219 = por %p217, %p218
      %p221 = scmp.ne.s32.totalorder %s206, %s220
      %p222 = scmp.eq.s32.totalorder %s27, 0
      %p223 = por %p221, %p222
      %s225 = sadd.s32 %s224, 1
      %p228 = scmp.eq.s32.totalorder %s21, 3
      %p229 = scmp.ne.s32.totalorder %s224, %s226
      %p230 = scmp.eq.s32.totalorder %s21, 0
      %p231 = por %p229, %p230
      %p232 = scmp.ne.s32.totalorder %s224, %s226
      %p233 = scmp.eq.s32.totalorder %s26, 3
      %p234 = por %p232, %p233
      %p235 = scmp.ne.s32.totalorder %s226, %s227
      %p236 = scmp.eq.s32.totalorder %s26, 0
      %p237 = por %p235, %p236
      %p238 = scmp.ne.s32.totalorder %s226, %s227
      %p239 = scmp.eq.s32.totalorder %s27, 3
      %p240 = por %p238, %p239
      %p242 = scmp.ne.s32.totalorder %s227, %s241
      %p243 = scmp.eq.s32.totalorder %s27, 0
      %p244 = por %p242, %p243
      %s246 = sadd.s32 %s245, 1
      %p249 = scmp.eq.s32.totalorder %s21, 3
      %p250 = scmp.ne.s32.totalorder %s245, %s247
      %p251 = scmp.eq.s32.totalorder %s21, 0
      %p252 = por %p250, %p251
      %p253 = scmp.ne.s32.totalorder %s245, %s247
      %p254 = scmp.eq.s32.totalorder %s26, 3
      %p255 = por %p253, %p254
      %p256 = scmp.ne.s32.totalorder %s247, %s248
      %p257 = scmp.eq.s32.totalorder %s26, 0
      %p258 = por %p256, %p257
      %p259 = scmp.ne.s32.totalorder %s247, %s248
      %p260 = scmp.eq.s32.totalorder %s27, 3
      %p261 = por %p259, %p260
      %p263 = scmp.ne.s32.totalorder %s248, %s262
      %p264 = scmp.eq.s32.totalorder %s27, 0
      %p265 = por %p263, %p264
      %s267 = sadd.s32 %s266, 1
      %p270 = scmp.eq.s32.totalorder %s21, 3
      %p271 = scmp.ne.s32.totalorder %s266, %s268
      %p272 = scmp.eq.s32.totalorder %s21, 0
      %p273 = por %p271, %p272
      %p274 = scmp.ne.s32.totalorder %s266, %s268
      %p275 = scmp.eq.s32.totalorder %s26, 3
      %p276 = por %p274, %p275
      %p277 = scmp.ne.s32.totalorder %s268, %s269
      %p278 = scmp.eq.s32.totalorder %s26, 0
      %p279 = por %p277, %p278
      %p280 = scmp.ne.s32.totalorder %s268, %s269
      %p281 = scmp.eq.s32.totalorder %s27, 3
      %p282 = por %p280, %p281
      %p284 = scmp.ne.s32.totalorder %s269, %s283
      %p285 = scmp.eq.s32.totalorder %s27, 0
      %p286 = por %p284, %p285
      %s288 = sadd.s32 %s287, 1
      %p291 = scmp.eq.s32.totalorder %s21, 3
      %p292 = scmp.ne.s32.totalorder %s287, %s289
      %p293 = scmp.eq.s32.totalorder %s21, 0
      %p294 = por %p292, %p293
      %p295 = scmp.ne.s32.totalorder %s287, %s289
      %p296 = scmp.eq.s32.totalorder %s26, 3
      %p297 = por %p295, %p296
      %p298 = scmp.ne.s32.totalorder %s289, %s290
      %p299 = scmp.eq.s32.totalorder %s26, 0
      %p300 = por %p298, %p299
      %p301 = scmp.ne.s32.totalorder %s289, %s290
      %p302 = scmp.eq.s32.totalorder %s27, 3
      %p303 = por %p301, %p302
      %p305 = scmp.ne.s32.totalorder %s290, %s304
      %p306 = scmp.eq.s32.totalorder %s27, 0
      %p307 = por %p305, %p306
      %s309 = sadd.s32 %s308, 1
      %p312 = scmp.eq.s32.totalorder %s21, 3
      %p313 = scmp.ne.s32.totalorder %s308, %s310
      %p314 = scmp.eq.s32.totalorder %s21, 0
      %p315 = por %p313, %p314
      %p316 = scmp.ne.s32.totalorder %s308, %s310
      %p317 = scmp.eq.s32.totalorder %s26, 3
      %p318 = por %p316, %p317
      %p319 = scmp.ne.s32.totalorder %s310, %s311
      %p320 = scmp.eq.s32.totalorder %s26, 0
      %p321 = por %p319, %p320
      %p322 = scmp.ne.s32.totalorder %s310, %s311
      %p323 = scmp.eq.s32.totalorder %s27, 3
      %p324 = por %p322, %p323
      %p326 = scmp.ne.s32.totalorder %s311, %s325
      %p327 = scmp.eq.s32.totalorder %s27, 0
      %p328 = por %p326, %p327
      %s330 = sadd.s32 %s329, 1
      %p333 = scmp.eq.s32.totalorder %s21, 3
      %p334 = scmp.ne.s32.totalorder %s329, %s331
      %p335 = scmp.eq.s32.totalorder %s21, 0
      %p336 = por %p334, %p335
      %p337 = scmp.ne.s32.totalorder %s329, %s331
      %p338 = scmp.eq.s32.totalorder %s26, 3
      %p339 = por %p337, %p338
      %p340 = scmp.ne.s32.totalorder %s331, %s332
      %p341 = scmp.eq.s32.totalorder %s26, 0
      %p342 = por %p340, %p341
      %p343 = scmp.ne.s32.totalorder %s331, %s332
      %p344 = scmp.eq.s32.totalorder %s27, 3
      %p345 = por %p343, %p344
      %p347 = scmp.ne.s32.totalorder %s332, %s346
      %p348 = scmp.eq.s32.totalorder %s27, 0
      %p349 = por %p347, %p348
      %s350 = ssub.s32 %s28, %s40
      %p351 = scmp.eq.s32.totalorder %s350, 0
      %s353 = sadd.s32 %s352, 1
      %s354 = scalar_select %p351, %s352, %s353
      %p357 = pneg %p351
      %p358 = scmp.eq.s32.totalorder %s21, 3
      %p359 = por %p357, %p358
      %p360 = scmp.ne.s32.totalorder %s352, %s355
      %p361 = scmp.eq.s32.totalorder %s21, 0
      %p362 = por %p360, %p361
      %p363 = scmp.ne.s32.totalorder %s352, %s355
      %p364 = scmp.eq.s32.totalorder %s26, 3
      %p365 = por %p363, %p364
      %p366 = scmp.ne.s32.totalorder %s355, %s356
      %p367 = scmp.eq.s32.totalorder %s26, 0
      %p368 = por %p366, %p367
      %p369 = scmp.ne.s32.totalorder %s355, %s356
      %p370 = scmp.eq.s32.totalorder %s27, 3
      %p371 = por %p369, %p370
      %p373 = scmp.ne.s32.totalorder %s356, %s372
      %p374 = scmp.eq.s32.totalorder %s27, 0
      %p375 = por %p373, %p374
      %p376 = scmp.le.s32.totalorder 1, %s21
      %p377 = scmp.lt.s32.totalorder %s21, 5
      %p378 = pnand %p376, %p377
      %p379 = pneg %p378
      // Predicated region
      $region9: #{tpu_custom_call.1} parent=5 // pred_check
        _
      $region10: #{tpu_custom_call.1} parent=5 // pred_check_branch
        %381 = sbr.rel (%p378) target = $region12
      $region11: #{tpu_custom_call.1} parent=5 // pred_region
        %s382 = ssub.s32 %s21, 1
        // Predicated region
        $region13: #{tpu_custom_call.1} parent=11 // pred_check
          %p383 = pneg %p132
        $region14: #{tpu_custom_call.1} parent=11 // pred_check_branch
          %385 = sbr.rel (%p383) target = $region16
        $region15: #{tpu_custom_call.1} parent=11 // pred_region
          _
        $region16: #{tpu_custom_call.1} parent=11 // pred_fallthru
          _
        // Predicated region
        $region17: #{tpu_custom_call.1} parent=11 // pred_check
          %p386 = pneg %p153
        $region18: #{tpu_custom_call.1} parent=11 // pred_check_branch
          %388 = sbr.rel (%p386) target = $region20
        $region19: #{tpu_custom_call.1} parent=11 // pred_region
          _
        $region20: #{tpu_custom_call.1} parent=11 // pred_fallthru
          _
        // Predicated region
        $region21: #{tpu_custom_call.1} parent=11 // pred_check
          %p389 = pneg %p174
        $region22: #{tpu_custom_call.1} parent=11 // pred_check_branch
          %391 = sbr.rel (%p389) target = $region24
        $region23: #{tpu_custom_call.1} parent=11 // pred_region
          _
        $region24: #{tpu_custom_call.1} parent=11 // pred_fallthru
          _
        // Predicated region
        $region25: #{tpu_custom_call.1} parent=11 // pred_check
          %p392 = pneg %p195
        $region26: #{tpu_custom_call.1} parent=11 // pred_check_branch
          %394 = sbr.rel (%p392) target = $region28
        $region27: #{tpu_custom_call.1} parent=11 // pred_region
          _
        $region28: #{tpu_custom_call.1} parent=11 // pred_fallthru
          _
        // Predicated region
        $region29: #{tpu_custom_call.1} parent=11 // pred_check
          %p395 = pneg %p216
        $region30: #{tpu_custom_call.1} parent=11 // pred_check_branch
          %397 = sbr.rel (%p395) target = $region32
        $region31: #{tpu_custom_call.1} parent=11 // pred_region
          _
        $region32: #{tpu_custom_call.1} parent=11 // pred_fallthru
          _
        // Predicated region
        $region33: #{tpu_custom_call.1} parent=11 // pred_check
          %p398 = pneg %p237
        $region34: #{tpu_custom_call.1} parent=11 // pred_check_branch
          %400 = sbr.rel (%p398) target = $region36
        $region35: #{tpu_custom_call.1} parent=11 // pred_region
          _
        $region36: #{tpu_custom_call.1} parent=11 // pred_fallthru
          _
        // Predicated region
        $region37: #{tpu_custom_call.1} parent=11 // pred_check
          %p401 = pneg %p258
        $region38: #{tpu_custom_call.1} parent=11 // pred_check_branch
          %403 = sbr.rel (%p401) target = $region40
        $region39: #{tpu_custom_call.1} parent=11 // pred_region
          _
        $region40: #{tpu_custom_call.1} parent=11 // pred_fallthru
          _
        // Predicated region
        $region41: #{tpu_custom_call.1} parent=11 // pred_check
          %p404 = pneg %p279
        $region42: #{tpu_custom_call.1} parent=11 // pred_check_branch
          %406 = sbr.rel (%p404) target = $region44
        $region43: #{tpu_custom_call.1} parent=11 // pred_region
          _
        $region44: #{tpu_custom_call.1} parent=11 // pred_fallthru
          _
        // Predicated region
        $region45: #{tpu_custom_call.1} parent=11 // pred_check
          %p407 = pneg %p300
        $region46: #{tpu_custom_call.1} parent=11 // pred_check_branch
          %409 = sbr.rel (%p407) target = $region48
        $region47: #{tpu_custom_call.1} parent=11 // pred_region
          _
        $region48: #{tpu_custom_call.1} parent=11 // pred_fallthru
          _
        // Predicated region
        $region49: #{tpu_custom_call.1} parent=11 // pred_check
          %p410 = pneg %p321
        $region50: #{tpu_custom_call.1} parent=11 // pred_check_branch
          %412 = sbr.rel (%p410) target = $region52
        $region51: #{tpu_custom_call.1} parent=11 // pred_region
          _
        $region52: #{tpu_custom_call.1} parent=11 // pred_fallthru
          _
        // Predicated region
        $region53: #{tpu_custom_call.1} parent=11 // pred_check
          %p413 = pneg %p342
        $region54: #{tpu_custom_call.1} parent=11 // pred_check_branch
          %415 = sbr.rel (%p413) target = $region56
        $region55: #{tpu_custom_call.1} parent=11 // pred_region
          _
        $region56: #{tpu_custom_call.1} parent=11 // pred_fallthru
          _
      $region12: #{tpu_custom_call.1} parent=5 // pred_fallthru
        _
      %p416 = scmp.lt.s32.totalorder %s21, 4
      // Predicated region
      $region57: #{tpu_custom_call.1} parent=5 // pred_check
        %p417 = pneg %p416
      $region58: #{tpu_custom_call.1} parent=5 // pred_check_branch
        %419 = sbr.rel (%p417) target = $region60
      $region59: #{tpu_custom_call.1} parent=5 // pred_region
        // Predicated region
        $region61: #{tpu_custom_call.1} parent=59 // pred_check
          %p420 = pneg %p53
        $region62: #{tpu_custom_call.1} parent=59 // pred_check_branch
          %422 = sbr.rel (%p420) target = $region64
        $region63: #{tpu_custom_call.1} parent=59 // pred_region
          %s423 = smul.u32 8, %s29
          %p424 = scmp.lt.s32.totalorder %s423, 31
          %s425 = scalar_select %p424, %s423, 31
          %s426 = smul.addr %s425, 4
          %s427 = scalar_lea.vmem %s0, %s426
          %s428 = smul.u32 8, %s29
        $region64: #{tpu_custom_call.1} parent=59 // pred_fallthru
          _
        // Predicated region
        $region65: #{tpu_custom_call.1} parent=59 // pred_check
          %p429 = pneg %p79
        $region66: #{tpu_custom_call.1} parent=59 // pred_check_branch
          %431 = sbr.rel (%p429) target = $region68
        $region67: #{tpu_custom_call.1} parent=59 // pred_region
          %s432 = smul.u32 8, %s29
          %p433 = scmp.lt.s32.totalorder %s432, 31
          %s434 = scalar_select %p433, %s432, 31
          %s435 = smul.addr %s434, 4
          %s436 = scalar_lea.vmem %s1, %s435
          %s437 = smul.u32 8, %s29
        $region68: #{tpu_custom_call.1} parent=59 // pred_fallthru
          _
        // Predicated region
        $region69: #{tpu_custom_call.1} parent=59 // pred_check
          %p438 = pneg %p105
        $region70: #{tpu_custom_call.1} parent=59 // pred_check_branch
          %440 = sbr.rel (%p438) target = $region72
        $region71: #{tpu_custom_call.1} parent=59 // pred_region
          %s441 = smul.u32 8, %s29
          %p442 = scmp.lt.s32.totalorder %s441, 31
          %s443 = scalar_select %p442, %s441, 31
          %s444 = smul.addr %s443, 8
          %s445 = scalar_lea.vmem %s2, %s444
          %s446 = smul.u32 8, %s29
        $region72: #{tpu_custom_call.1} parent=59 // pred_fallthru
          _
      $region60: #{tpu_custom_call.1} parent=5 // pred_fallthru
        _
      %p447 = scmp.le.s32.totalorder 1, %s21
      %p448 = scmp.lt.s32.totalorder %s21, 5
      %p449 = pnand %p447, %p448
      %p450 = pneg %p449
      // Predicated region
      $region73: #{tpu_custom_call.1} parent=5 // pred_check
        _
      $region74: #{tpu_custom_call.1} parent=5 // pred_check_branch
        %452 = sbr.rel (%p449) target = $region76
      $region75: #{tpu_custom_call.1} parent=5 // pred_region
        %s453 = ssub.s32 %s21, 1
        %s454 = smul.u32 8, %s31
        %p455 = scmp.lt.s32.totalorder %s454, 31
        %s456 = scalar_select %p455, %s454, 31
        %s457 = smul.addr %s456, 4
        %s458 = scalar_lea.vmem %s0, %s457
        %p459 = pneg %p59
        %p460 = pneg %p56
        %s461 = smul.u32 8, %s31
        %p462 = scmp.lt.s32.totalorder %s461, 31
        %s463 = scalar_select %p462, %s461, 31
        %s464 = smul.addr %s463, 4
        %s465 = scalar_lea.vmem %s1, %s464
        %p466 = pneg %p85
        %p467 = pneg %p82
        %s468 = smul.u32 8, %s31
        %p469 = scmp.lt.s32.totalorder %s468, 31
        %s470 = scalar_select %p469, %s468, 31
        %s471 = smul.addr %s470, 8
        %s472 = scalar_lea.vmem %s2, %s471
        %p473 = pneg %p111
        %p474 = pneg %p108
        %p475 = pneg %p132
        %p476 = pneg %p129
        %p477 = pneg %p153
        %p478 = pneg %p150
        %p479 = pneg %p174
        %p480 = pneg %p171
        %p481 = pneg %p195
        %p482 = pneg %p192
        %p483 = pneg %p216
        %p484 = pneg %p213
        %p485 = pneg %p237
        %p486 = pneg %p234
        %p487 = pneg %p258
        %p488 = pneg %p255
        %p489 = pneg %p279
        %p490 = pneg %p276
        %p491 = pneg %p300
        %p492 = pneg %p297
        %p493 = pneg %p321
        %p494 = pneg %p318
        %p495 = pneg %p342
        %p496 = pneg %p339
        %p497 = pneg %p368
        %p498 = pneg %p365
        %s499 = smul.u32 8, %s31
        %p500 = scmp.lt.s32.totalorder %s499, 31
        %s501 = scalar_select %p500, %s499, 31
        %s502 = smul.addr %s501, 4
        %s503 = scalar_lea.vmem %s0, %s502
        %s504 = smul.u32 8, %s31
        %s505 = smul.u32 8, %s31
        %p506 = scmp.lt.s32.totalorder %s505, 31
        %s507 = scalar_select %p506, %s505, 31
        %s508 = smul.addr %s507, 4
        %s509 = scalar_lea.vmem %s1, %s508
        %s510 = smul.u32 8, %s31
        %s511 = smul.u32 8, %s31
        %p512 = scmp.lt.s32.totalorder %s511, 31
        %s513 = scalar_select %p512, %s511, 31
        %s514 = smul.addr %s513, 8
        %s515 = scalar_lea.vmem %s2, %s514
        %s516 = smul.u32 8, %s31
        %s517 = smul.u32 16, %s30
        %v519 = vld [vmem:[%s503] sm:$0xf]
        %v520 = vld [vmem:[%s503 + $0x4] sm:$0xf]
        %v521 = vld [vmem:[%s503 + $0x8] sm:$0xf]
        %v522 = vld [vmem:[%s503 + $0xc] sm:$0xf]
        %v523 = vld [vmem:[%s503 + $0x10] sm:$0xf]
        %v524 = vld [vmem:[%s503 + $0x14] sm:$0xf]
        %v525 = vld [vmem:[%s503 + $0x18] sm:$0xf]
        %v526 = vld [vmem:[%s503 + $0x1c] sm:$0xf]
        %v527 = vld [vmem:[%s509] sm:$0xf]
        %v528 = vld [vmem:[%s509 + $0x4] sm:$0xf]
        %v529 = vld [vmem:[%s509 + $0x8] sm:$0xf]
        %v530 = vld [vmem:[%s509 + $0xc] sm:$0xf]
        %v531 = vld [vmem:[%s509 + $0x10] sm:$0xf]
        %v532 = vld [vmem:[%s509 + $0x14] sm:$0xf]
        %v533 = vld [vmem:[%s509 + $0x18] sm:$0xf]
        %v534 = vld [vmem:[%s509 + $0x1c] sm:$0xf]
        %v535 = vld [vmem:[%s3] sm:$0xf]
        %v536 = vld [vmem:[%s3 + $0x4] sm:$0xf]
        %v537 = vld [vmem:[%s3 + $0x8] sm:$0xf]
        %v538 = vld [vmem:[%s3 + $0xc] sm:$0xf]
        %v539 = vld [vmem:[%s3 + $0x10] sm:$0xf]
        %v540 = vld [vmem:[%s4] sm:$0x1]
        %v542 = vlaneseq
        %v543 = vshrl.u32 %v542, 7
        %v544 = vsub.s32 0, %v543
        %v545 = vrot.slane %v540, %v544
        %v555 = vunpack.c.l.b16 %v519
        %v556 = vunpack.c.l.b16 %v520
        %v557 = vunpack.c.l.b16 %v521
        %v558 = vunpack.c.l.b16 %v522
        %v559 = vunpack.c.l.b16 %v523
        %v560 = vunpack.c.l.b16 %v524
        %v561 = vunpack.c.l.b16 %v525
        %v562 = vunpack.c.l.b16 %v526
        %v563 = vpack.c.b16 %v556, %v555
        %v564 = vpack.c.b16 %v558, %v557
        %v565 = vpack.c.b16 %v560, %v559
        %v566 = vpack.c.b16 %v562, %v561
        %v572 = vunpack.c.l.b16 %v535
        %v573 = vunpack.c.l.b16 %v536
        %v574 = vunpack.c.l.b16 %v537
        %v575 = vunpack.c.l.b16 %v538
        %v576 = vunpack.c.l.b16 %v539
        %v577 = vpack.c.b16 %v573, %v572
        %v578 = vpack.c.b16 %v575, %v574
        %v579 = vpack.c.b16 %v576, %v576
        %vm582 = vcmask 326656
        %v584 = vsel %vm582, %v563, 0
        %v587 = vsel %vm582, %v564, 0
        %v590 = vsel %vm582, %v565, 0
        %v593 = vsel %vm582, %v566, 0
        %vm595 = vcmask 1043456
        %v597 = vsel %vm595, %v579, 0
        %599 = vmatprep.subr.bf16.mxu0 0
        %600 = vmatpush1.bf16.msra.mxu0 %v577
        %601 = vmatprep.subr.bf16.mxu0 0
        %602 = vmatpush1.bf16.msra.mxu0 %v578
        %603 = vmatprep.subr.bf16.mxu0 0
        %604 = vmatpush1.bf16.msra.mxu0 %v597
        %605 = vmatprep.subr.bf16.mxu0 0
        %606 = vmatpush1.bf16.msra.mxu0 0
        %607 = vmatprep.subr.bf16.mxu0 0
        %608 = vmatpush1.bf16.msra.mxu0 0
        %609 = vmatprep.subr.bf16.mxu0 0
        %610 = vmatpush1.bf16.msra.mxu0 0
        %611 = vmatprep.subr.bf16.mxu0 0
        %612 = vmatpush1.bf16.msra.mxu0 0
        %613 = vmatprep.subr.bf16.mxu0 0
        %614 = vmatpush1.bf16.msra.mxu0 0
        %615 = vmatprep.subr.bf16.mxu0 0
        %616 = vmatpush1.bf16.msra.mxu0 0
        %617 = vmatprep.subr.bf16.mxu0 0
        %618 = vmatpush1.bf16.msra.mxu0 0
        %619 = vmatprep.subr.bf16.mxu0 0
        %620 = vmatpush1.bf16.msra.mxu0 0
        %621 = vmatprep.subr.bf16.mxu0 0
        %622 = vmatpush1.bf16.msra.mxu0 0
        %623 = vmatprep.subr.bf16.mxu0 0
        %624 = vmatpush1.bf16.msra.mxu0 0
        %625 = vmatprep.subr.bf16.mxu0 0
        %626 = vmatpush1.bf16.msra.mxu0 0
        %627 = vmatprep.subr.bf16.mxu0 0
        %628 = vmatpush1.bf16.msra.mxu0 0
        %629 = vmatprep.subr.bf16.mxu0 0
        %630 = vmatpush1.bf16.msra.mxu0 0
        %631 = vmatprep.mubr.bf16.mxu0 0
        %632 = vmatmul.mubr.bf16.gmra.mrb[0].mxu0 %v584
        %v633 = vpop.f32.mrb[0].mxu0
        %v634 = vadd.f32 %v545, %v633
        %v635 = vpop.f32.mrb[0].mxu0
        %v636 = vpop.f32.mrb[0].mxu0
        %v637 = vadd.f32 %v545, %v636
        %v638 = vpop.f32.mrb[0].mxu0
        %639 = vmatprep.mubr.bf16.mxu0 0
        %640 = vmatmul.mubr.bf16.gmra.mrb[0].mxu0 %v587
        %v641 = vpop.f32.mrb[0].mxu0
        %v642 = vadd.f32 %v545, %v641
        %v643 = vpop.f32.mrb[0].mxu0
        %v644 = vpop.f32.mrb[0].mxu0
        %v645 = vadd.f32 %v545, %v644
        %v646 = vpop.f32.mrb[0].mxu0
        %647 = vmatprep.mubr.bf16.mxu0 0
        %648 = vmatmul.mubr.bf16.gmra.mrb[0].mxu0 %v590
        %v649 = vpop.f32.mrb[0].mxu0
        %v650 = vadd.f32 %v545, %v649
        %v651 = vpop.f32.mrb[0].mxu0
        %v652 = vpop.f32.mrb[0].mxu0
        %v653 = vadd.f32 %v545, %v652
        %v654 = vpop.f32.mrb[0].mxu0
        %655 = vmatprep.mubr.bf16.mxu0 0
        %656 = vmatmul.mubr.bf16.gmra.mrb[0].mxu0 %v593
        %v657 = vpop.f32.mrb[0].mxu0
        %v658 = vadd.f32 %v545, %v657
        %v659 = vpop.f32.mrb[0].mxu0
        %v660 = vpop.f32.mrb[0].mxu0
        %v661 = vadd.f32 %v545, %v660
        %v662 = vpop.f32.mrb[0].mxu0
        %663 = vdwg.mxu0
        %vm664 = vcmp.gt.f32.partialorder %v634, 0.0
        %vm665 = vcmp.gt.f32.partialorder %v637, 0.0
        %vm666 = vcmp.gt.f32.partialorder %v642, 0.0
        %vm667 = vcmp.gt.f32.partialorder %v645, 0.0
        %vm668 = vcmp.gt.f32.partialorder %v650, 0.0
        %vm669 = vcmp.gt.f32.partialorder %v653, 0.0
        %vm670 = vcmp.gt.f32.partialorder %v658, 0.0
        %vm671 = vcmp.gt.f32.partialorder %v661, 0.0
        %v672 = vmul.f32 %v634, 0.01
        %v673 = vmul.f32 %v637, 0.01
        %v674 = vmul.f32 %v642, 0.01
        %v675 = vmul.f32 %v645, 0.01
        %v676 = vmul.f32 %v650, 0.01
        %v677 = vmul.f32 %v653, 0.01
        %v678 = vmul.f32 %v658, 0.01
        %v679 = vmul.f32 %v661, 0.01
        %v680 = vsel %vm664, %v634, %v672
        %v681 = vsel %vm665, %v637, %v673
        %v682 = vsel %vm666, %v642, %v674
        %v683 = vsel %vm667, %v645, %v675
        %v684 = vsel %vm668, %v650, %v676
        %v685 = vsel %vm669, %v653, %v677
        %v686 = vsel %vm670, %v658, %v678
        %v687 = vsel %vm671, %v661, %v679
        %v688 = vpack.c.bf16 %v681, %v680
        %v689 = vpack.c.bf16 %v683, %v682
        %v690 = vpack.c.bf16 %v685, %v684
        %v691 = vpack.c.bf16 %v687, %v686
        %v692 = vld [vmem:[%s5] sm:$0xf]
        %v693 = vld [vmem:[%s5 + $0x4] sm:$0xf]
        %v694 = vld [vmem:[%s5 + $0x8] sm:$0xf]
        %v695 = vld [vmem:[%s5 + $0xc] sm:$0xf]
        %v696 = vld [vmem:[%s6] sm:$0x1]
        %v698 = vlaneseq
        %v699 = vshrl.u32 %v698, 7
        %v700 = vsub.s32 0, %v699
        %v701 = vrot.slane %v696, %v700
        %v707 = vunpack.c.l.b16 %v692
        %v708 = vunpack.c.l.b16 %v693
        %v709 = vunpack.c.l.b16 %v694
        %v710 = vunpack.c.l.b16 %v695
        %v711 = vpack.c.b16 %v708, %v707
        %v712 = vpack.c.b16 %v710, %v709
        %vm715 = vcmask 261120
        %v717 = vsel %vm715, %v688, 0
        %v720 = vsel %vm715, %v689, 0
        %v723 = vsel %vm715, %v690, 0
        %v726 = vsel %vm715, %v691, 0
        %728 = vmatprep.subr.bf16.mxu0 0
        %729 = vmatpush1.bf16.msra.mxu0 %v711
        %730 = vmatprep.subr.bf16.mxu0 0
        %731 = vmatpush1.bf16.msra.mxu0 %v712
        %732 = vmatprep.subr.bf16.mxu0 0
        %733 = vmatpush1.bf16.msra.mxu0 0
        %734 = vmatprep.subr.bf16.mxu0 0
        %735 = vmatpush1.bf16.msra.mxu0 0
        %736 = vmatprep.subr.bf16.mxu0 0
        %737 = vmatpush1.bf16.msra.mxu0 0
        %738 = vmatprep.subr.bf16.mxu0 0
        %739 = vmatpush1.bf16.msra.mxu0 0
        %740 = vmatprep.subr.bf16.mxu0 0
        %741 = vmatpush1.bf16.msra.mxu0 0
        %742 = vmatprep.subr.bf16.mxu0 0
        %743 = vmatpush1.bf16.msra.mxu0 0
        %744 = vmatprep.subr.bf16.mxu0 0
        %745 = vmatpush1.bf16.msra.mxu0 0
        %746 = vmatprep.subr.bf16.mxu0 0
        %747 = vmatpush1.bf16.msra.mxu0 0
        %748 = vmatprep.subr.bf16.mxu0 0
        %749 = vmatpush1.bf16.msra.mxu0 0
        %750 = vmatprep.subr.bf16.mxu0 0
        %751 = vmatpush1.bf16.msra.mxu0 0
        %752 = vmatprep.subr.bf16.mxu0 0
        %753 = vmatpush1.bf16.msra.mxu0 0
        %754 = vmatprep.subr.bf16.mxu0 0
        %755 = vmatpush1.bf16.msra.mxu0 0
        %756 = vmatprep.subr.bf16.mxu0 0
        %757 = vmatpush1.bf16.msra.mxu0 0
        %758 = vmatprep.subr.bf16.mxu0 0
        %759 = vmatpush1.bf16.msra.mxu0 0
        %760 = vmatprep.mubr.bf16.mxu0 0
        %761 = vmatmul.mubr.bf16.gmra.mrb[0].mxu0 %v717
        %v762 = vpop.f32.mrb[0].mxu0
        %v763 = vadd.f32 %v701, %v762
        %v764 = vpop.f32.mrb[0].mxu0
        %v765 = vpop.f32.mrb[0].mxu0
        %v766 = vadd.f32 %v701, %v765
        %v767 = vpop.f32.mrb[0].mxu0
        %768 = vmatprep.mubr.bf16.mxu0 0
        %769 = vmatmul.mubr.bf16.gmra.mrb[0].mxu0 %v720
        %v770 = vpop.f32.mrb[0].mxu0
        %v771 = vadd.f32 %v701, %v770
        %v772 = vpop.f32.mrb[0].mxu0
        %v773 = vpop.f32.mrb[0].mxu0
        %v774 = vadd.f32 %v701, %v773
        %v775 = vpop.f32.mrb[0].mxu0
        %776 = vmatprep.mubr.bf16.mxu0 0
        %777 = vmatmul.mubr.bf16.gmra.mrb[0].mxu0 %v723
        %v778 = vpop.f32.mrb[0].mxu0
        %v779 = vadd.f32 %v701, %v778
        %v780 = vpop.f32.mrb[0].mxu0
        %v781 = vpop.f32.mrb[0].mxu0
        %v782 = vadd.f32 %v701, %v781
        %v783 = vpop.f32.mrb[0].mxu0
        %784 = vmatprep.mubr.bf16.mxu0 0
        %785 = vmatmul.mubr.bf16.gmra.mrb[0].mxu0 %v726
        %v786 = vpop.f32.mrb[0].mxu0
        %v787 = vadd.f32 %v701, %v786
        %v788 = vpop.f32.mrb[0].mxu0
        %v789 = vpop.f32.mrb[0].mxu0
        %v790 = vadd.f32 %v701, %v789
        %v791 = vpop.f32.mrb[0].mxu0
        %792 = vdwg.mxu0
        %vm793 = vcmp.gt.f32.partialorder %v763, 0.0
        %vm794 = vcmp.gt.f32.partialorder %v766, 0.0
        %vm795 = vcmp.gt.f32.partialorder %v771, 0.0
        %vm796 = vcmp.gt.f32.partialorder %v774, 0.0
        %vm797 = vcmp.gt.f32.partialorder %v779, 0.0
        %vm798 = vcmp.gt.f32.partialorder %v782, 0.0
        %vm799 = vcmp.gt.f32.partialorder %v787, 0.0
        %vm800 = vcmp.gt.f32.partialorder %v790, 0.0
        %v801 = vmul.f32 %v763, 0.01
        %v802 = vmul.f32 %v766, 0.01
        %v803 = vmul.f32 %v771, 0.01
        %v804 = vmul.f32 %v774, 0.01
        %v805 = vmul.f32 %v779, 0.01
        %v806 = vmul.f32 %v782, 0.01
        %v807 = vmul.f32 %v787, 0.01
        %v808 = vmul.f32 %v790, 0.01
        %v809 = vsel %vm793, %v763, %v801
        %v810 = vsel %vm794, %v766, %v802
        %v811 = vsel %vm795, %v771, %v803
        %v812 = vsel %vm796, %v774, %v804
        %v813 = vsel %vm797, %v779, %v805
        %v814 = vsel %vm798, %v782, %v806
        %v815 = vsel %vm799, %v787, %v807
        %v816 = vsel %vm800, %v790, %v808
        %v817 = vunpack.c.l.bf16 %v519
        %v818 = vunpack.c.l.bf16 %v520
        %v819 = vunpack.c.l.bf16 %v521
        %v820 = vunpack.c.l.bf16 %v522
        %v821 = vunpack.c.l.bf16 %v523
        %v822 = vunpack.c.l.bf16 %v524
        %v823 = vunpack.c.l.bf16 %v525
        %v824 = vunpack.c.l.bf16 %v526
        %v825 = vadd.f32 %v809, %v817
        %v826 = vadd.f32 %v810, %v818
        %v827 = vadd.f32 %v811, %v819
        %v828 = vadd.f32 %v812, %v820
        %v829 = vadd.f32 %v813, %v821
        %v830 = vadd.f32 %v814, %v822
        %v831 = vadd.f32 %v815, %v823
        %v832 = vadd.f32 %v816, %v824
        %v833 = vpack.c.bf16 %v826, %v825
        %v834 = vpack.c.bf16 %v828, %v827
        %v835 = vpack.c.bf16 %v830, %v829
        %v836 = vpack.c.bf16 %v832, %v831
        %v845 = vunpack.c.l.b16 %v527
        %v846 = vunpack.c.l.b16 %v528
        %v847 = vunpack.c.l.b16 %v529
        %v848 = vunpack.c.l.b16 %v530
        %v849 = vunpack.c.l.b16 %v531
        %v850 = vunpack.c.l.b16 %v532
        %v851 = vunpack.c.l.b16 %v533
        %v852 = vunpack.c.l.b16 %v534
        %v853 = vpack.c.b16 %v846, %v845
        %v854 = vpack.c.b16 %v848, %v847
        %v855 = vpack.c.b16 %v850, %v849
        %v856 = vpack.c.b16 %v852, %v851
        %857 = vrot.lane.b32.xlu0 %v853, 32
        %v858 = vpop.permute.xlu0 %857
        %859 = vrot.lane.b32.xlu0 %v854, 32
        %v860 = vpop.permute.xlu0 %859
        %861 = vrot.lane.b32.xlu0 %v855, 32
        %v862 = vpop.permute.xlu0 %861
        %863 = vrot.lane.b32.xlu0 %v856, 32
        %v864 = vpop.permute.xlu0 %863
        %v867 = vsel %vm715, %v833, %v858
        %v870 = vsel %vm715, %v834, %v860
        %v873 = vsel %vm715, %v835, %v862
        %v876 = vsel %vm715, %v836, %v864
        %v877 = vld [vmem:[%s7] sm:$0xf]
        %v878 = vld [vmem:[%s7 + $0x4] sm:$0xf]
        %v879 = vld [vmem:[%s7 + $0x8] sm:$0xf]
        %v880 = vld [vmem:[%s7 + $0xc] sm:$0xf]
        %v881 = vld [vmem:[%s7 + $0x10] sm:$0xf]
        %v882 = vld [vmem:[%s7 + $0x14] sm:$0xf]
        %v883 = vld [vmem:[%s7 + $0x18] sm:$0xf]
        %v884 = vld [vmem:[%s7 + $0x1c] sm:$0xf]
        %v885 = vld [vmem:[%s7 + $0x20] sm:$0xf]
        %v886 = vld [vmem:[%s7 + $0x24] sm:$0xf]
        %v887 = vld [vmem:[%s7 + $0x28] sm:$0xf]
        %v888 = vld [vmem:[%s7 + $0x2c] sm:$0xf]
        %v901 = vunpack.c.l.b16 %v877
        %v902 = vunpack.c.l.b16 %v878
        %v903 = vunpack.c.l.b16 %v879
        %v904 = vunpack.c.l.b16 %v880
        %v905 = vunpack.c.l.b16 %v881
        %v906 = vunpack.c.l.b16 %v882
        %v907 = vunpack.c.l.b16 %v883
        %v908 = vunpack.c.l.b16 %v884
        %v909 = vunpack.c.l.b16 %v885
        %v910 = vunpack.c.l.b16 %v886
        %v911 = vunpack.c.l.b16 %v887
        %v912 = vunpack.c.l.b16 %v888
        %v913 = vpack.c.b16 %v902, %v901
        %v914 = vpack.c.b16 %v904, %v903
        %v915 = vpack.c.b16 %v906, %v905
        %v916 = vpack.c.b16 %v908, %v907
        %v917 = vpack.c.b16 %v910, %v909
        %v918 = vpack.c.b16 %v912, %v911
        %vm925 = vcmask 785408
        %v926 = vsel %vm925, %v867, 0
        %v928 = vsel %vm925, %v870, 0
        %v930 = vsel %vm925, %v873, 0
        %v932 = vsel %vm925, %v876, 0
        %934 = vmatprep.subr.bf16.mxu0 0
        %935 = vmatpush1.bf16.msra.mxu0 %v913
        %936 = vmatprep.subr.bf16.mxu0 0
        %937 = vmatpush1.bf16.msra.mxu0 %v914
        %938 = vmatprep.subr.bf16.mxu0 0
        %939 = vmatpush1.bf16.msra.mxu0 %v915
        %940 = vmatprep.subr.bf16.mxu0 0
        %941 = vmatpush1.bf16.msra.mxu0 %v916
        %942 = vmatprep.subr.bf16.mxu0 0
        %943 = vmatpush1.bf16.msra.mxu0 %v917
        %944 = vmatprep.subr.bf16.mxu0 0
        %945 = vmatpush1.bf16.msra.mxu0 %v918
        %946 = vmatprep.subr.bf16.mxu0 0
        %947 = vmatpush1.bf16.msra.mxu0 0
        %948 = vmatprep.subr.bf16.mxu0 0
        %949 = vmatpush1.bf16.msra.mxu0 0
        %950 = vmatprep.subr.bf16.mxu0 0
        %951 = vmatpush1.bf16.msra.mxu0 0
        %952 = vmatprep.subr.bf16.mxu0 0
        %953 = vmatpush1.bf16.msra.mxu0 0
        %954 = vmatprep.subr.bf16.mxu0 0
        %955 = vmatpush1.bf16.msra.mxu0 0
        %956 = vmatprep.subr.bf16.mxu0 0
        %957 = vmatpush1.bf16.msra.mxu0 0
        %958 = vmatprep.subr.bf16.mxu0 0
        %959 = vmatpush1.bf16.msra.mxu0 0
        %960 = vmatprep.subr.bf16.mxu0 0
        %961 = vmatpush1.bf16.msra.mxu0 0
        %962 = vmatprep.subr.bf16.mxu0 0
        %963 = vmatpush1.bf16.msra.mxu0 0
        %964 = vmatprep.subr.bf16.mxu0 0
        %965 = vmatpush1.bf16.msra.mxu0 0
        %966 = vmatprep.mubr.bf16.mxu0 0
        %967 = vmatmul.mubr.bf16.gmra.mrb[0].mxu0 %v926
        %v968 = vpop.f32.mrb[0].mxu0
        %v969 = vadd.f32 0.0, %v968
        %v970 = vpop.f32.mrb[0].mxu0
        %v971 = vpop.f32.mrb[0].mxu0
        %v972 = vadd.f32 0.0, %v971
        %v973 = vpop.f32.mrb[0].mxu0
        %974 = vmatprep.mubr.bf16.mxu0 0
        %975 = vmatmul.mubr.bf16.gmra.mrb[0].mxu0 %v928
        %v976 = vpop.f32.mrb[0].mxu0
        %v977 = vadd.f32 0.0, %v976
        %v978 = vpop.f32.mrb[0].mxu0
        %v979 = vpop.f32.mrb[0].mxu0
        %v980 = vadd.f32 0.0, %v979
        %v981 = vpop.f32.mrb[0].mxu0
        %982 = vmatprep.mubr.bf16.mxu0 0
        %983 = vmatmul.mubr.bf16.gmra.mrb[0].mxu0 %v930
        %v984 = vpop.f32.mrb[0].mxu0
        %v985 = vadd.f32 0.0, %v984
        %v986 = vpop.f32.mrb[0].mxu0
        %v987 = vpop.f32.mrb[0].mxu0
        %v988 = vadd.f32 0.0, %v987
        %v989 = vpop.f32.mrb[0].mxu0
        %990 = vmatprep.mubr.bf16.mxu0 0
        %991 = vmatmul.mubr.bf16.gmra.mrb[0].mxu0 %v932
        %v992 = vpop.f32.mrb[0].mxu0
        %v993 = vadd.f32 0.0, %v992
        %v994 = vpop.f32.mrb[0].mxu0
        %v995 = vpop.f32.mrb[0].mxu0
        %v996 = vadd.f32 0.0, %v995
        %v997 = vpop.f32.mrb[0].mxu0
        %998 = vdwg.mxu0
        %v999 = vld [vmem:[%s8] sm:$0x1]
        %v1001 = vlaneseq
        %v1002 = vshrl.u32 %v1001, 7
        %v1003 = vsub.s32 0, %v1002
        %v1004 = vrot.slane %v999, %v1003
        %v1006 = vadd.f32 %v969, %v1004
        %v1007 = vadd.f32 %v972, %v1004
        %v1008 = vadd.f32 %v977, %v1004
        %v1009 = vadd.f32 %v980, %v1004
        %v1010 = vadd.f32 %v985, %v1004
        %v1011 = vadd.f32 %v988, %v1004
        %v1012 = vadd.f32 %v993, %v1004
        %v1013 = vadd.f32 %v996, %v1004
        %v1014 = vxor.u32 %v1006, 2147483648
        %v1015 = vxor.u32 %v1007, 2147483648
        %v1016 = vxor.u32 %v1008, 2147483648
        %v1017 = vxor.u32 %v1009, 2147483648
        %v1018 = vxor.u32 %v1010, 2147483648
        %v1019 = vxor.u32 %v1011, 2147483648
        %v1020 = vxor.u32 %v1012, 2147483648
        %v1021 = vxor.u32 %v1013, 2147483648
        %v1022 = vmul.f32 %v1014, 1.442695
        %v1023 = vpow.pop %v1022
        %v1024 = vmul.f32 %v1015, 1.442695
        %v1025 = vpow.pop %v1024
        %v1026 = vmul.f32 %v1016, 1.442695
        %v1027 = vpow.pop %v1026
        %v1028 = vmul.f32 %v1017, 1.442695
        %v1029 = vpow.pop %v1028
        %v1030 = vmul.f32 %v1018, 1.442695
        %v1031 = vpow.pop %v1030
        %v1032 = vmul.f32 %v1019, 1.442695
        %v1033 = vpow.pop %v1032
        %v1034 = vmul.f32 %v1020, 1.442695
        %v1035 = vpow.pop %v1034
        %v1036 = vmul.f32 %v1021, 1.442695
        %v1037 = vpow.pop %v1036
        %v1038 = vadd.f32 %v1023, 1.0
        %v1039 = vadd.f32 %v1025, 1.0
        %v1040 = vadd.f32 %v1027, 1.0
        %v1041 = vadd.f32 %v1029, 1.0
        %v1042 = vadd.f32 %v1031, 1.0
        %v1043 = vadd.f32 %v1033, 1.0
        %v1044 = vadd.f32 %v1035, 1.0
        %v1045 = vadd.f32 %v1037, 1.0
        %v1046 = vrcp.pop %v1038
        %v1047 = vmul.f32 1.0, %v1046
        %v1048 = vrcp.pop %v1039
        %v1049 = vmul.f32 1.0, %v1048
        %v1050 = vrcp.pop %v1040
        %v1051 = vmul.f32 1.0, %v1050
        %v1052 = vrcp.pop %v1041
        %v1053 = vmul.f32 1.0, %v1052
        %v1054 = vrcp.pop %v1042
        %v1055 = vmul.f32 1.0, %v1054
        %v1056 = vrcp.pop %v1043
        %v1057 = vmul.f32 1.0, %v1056
        %v1058 = vrcp.pop %v1044
        %v1059 = vmul.f32 1.0, %v1058
        %v1060 = vrcp.pop %v1045
        %v1061 = vmul.f32 1.0, %v1060
        %v1062 = vunpack.c.l.bf16 %v527
        %v1063 = vunpack.c.l.bf16 %v528
        %v1064 = vunpack.c.l.bf16 %v529
        %v1065 = vunpack.c.l.bf16 %v530
        %v1066 = vunpack.c.l.bf16 %v531
        %v1067 = vunpack.c.l.bf16 %v532
        %v1068 = vunpack.c.l.bf16 %v533
        %v1069 = vunpack.c.l.bf16 %v534
        %1078 = vrot.lane.b32.xlu0 %v1062, 32
        %v1079 = vpop.permute.xlu0 %1078
        %1080 = vrot.lane.b32.xlu0 %v1063, 32
        %v1081 = vpop.permute.xlu0 %1080
        %1082 = vrot.lane.b32.xlu0 %v1064, 32
        %v1083 = vpop.permute.xlu0 %1082
        %1084 = vrot.lane.b32.xlu0 %v1065, 32
        %v1085 = vpop.permute.xlu0 %1084
        %1086 = vrot.lane.b32.xlu0 %v1066, 32
        %v1087 = vpop.permute.xlu0 %1086
        %1088 = vrot.lane.b32.xlu0 %v1067, 32
        %v1089 = vpop.permute.xlu0 %1088
        %1090 = vrot.lane.b32.xlu0 %v1068, 32
        %v1091 = vpop.permute.xlu0 %1090
        %1092 = vrot.lane.b32.xlu0 %v1069, 32
        %v1093 = vpop.permute.xlu0 %1092
        %v1102 = vmul.f32 %v1047, %v1079
        %v1103 = vmul.f32 %v1049, %v1081
        %v1104 = vmul.f32 %v1051, %v1083
        %v1105 = vmul.f32 %v1053, %v1085
        %v1106 = vmul.f32 %v1055, %v1087
        %v1107 = vmul.f32 %v1057, %v1089
        %v1108 = vmul.f32 %v1059, %v1091
        %v1109 = vmul.f32 %v1061, %v1093
        %v1110 = vpack.c.bf16 %v1103, %v1102
        %v1111 = vpack.c.bf16 %v1105, %v1104
        %v1112 = vpack.c.bf16 %v1107, %v1106
        %v1113 = vpack.c.bf16 %v1109, %v1108
        %v1114 = vld [vmem:[%s12] sm:$0xf]
        %v1115 = vld [vmem:[%s12 + $0x4] sm:$0xf]
        %v1116 = vld [vmem:[%s12 + $0x8] sm:$0xf]
        %v1117 = vld [vmem:[%s12 + $0xc] sm:$0xf]
        %1122 = vrot.lane.b32.xlu0 %v1110, 96
        %v1123 = vpop.permute.xlu0 %1122
        %1124 = vrot.lane.b32.xlu0 %v1111, 96
        %v1125 = vpop.permute.xlu0 %1124
        %1126 = vrot.lane.b32.xlu0 %v1112, 96
        %v1127 = vpop.permute.xlu0 %1126
        %1128 = vrot.lane.b32.xlu0 %v1113, 96
        %v1129 = vpop.permute.xlu0 %1128
        %v1134 = vunpack.c.l.b16 %v1114
        %v1135 = vunpack.c.l.b16 %v1115
        %v1136 = vunpack.c.l.b16 %v1116
        %v1137 = vunpack.c.l.b16 %v1117
        %v1138 = vpack.c.b16 %v1135, %v1134
        %v1139 = vpack.c.b16 %v1137, %v1136
        %v1143 = vsel %vm715, %v1123, 0
        %v1146 = vsel %vm715, %v1125, 0
        %v1149 = vsel %vm715, %v1127, 0
        %v1152 = vsel %vm715, %v1129, 0
        %1154 = vmatprep.subr.bf16.mxu0 0
        %1155 = vmatpush1.bf16.msra.mxu0 %v1138
        %1156 = vmatprep.subr.bf16.mxu0 0
        %1157 = vmatpush1.bf16.msra.mxu0 %v1139
        %1158 = vmatprep.subr.bf16.mxu0 0
        %1159 = vmatpush1.bf16.msra.mxu0 0
        %1160 = vmatprep.subr.bf16.mxu0 0
        %1161 = vmatpush1.bf16.msra.mxu0 0
        %1162 = vmatprep.subr.bf16.mxu0 0
        %1163 = vmatpush1.bf16.msra.mxu0 0
        %1164 = vmatprep.subr.bf16.mxu0 0
        %1165 = vmatpush1.bf16.msra.mxu0 0
        %1166 = vmatprep.subr.bf16.mxu0 0
        %1167 = vmatpush1.bf16.msra.mxu0 0
        %1168 = vmatprep.subr.bf16.mxu0 0
        %1169 = vmatpush1.bf16.msra.mxu0 0
        %1170 = vmatprep.subr.bf16.mxu0 0
        %1171 = vmatpush1.bf16.msra.mxu0 0
        %1172 = vmatprep.subr.bf16.mxu0 0
        %1173 = vmatpush1.bf16.msra.mxu0 0
        %1174 = vmatprep.subr.bf16.mxu0 0
        %1175 = vmatpush1.bf16.msra.mxu0 0
        %1176 = vmatprep.subr.bf16.mxu0 0
        %1177 = vmatpush1.bf16.msra.mxu0 0
        %1178 = vmatprep.subr.bf16.mxu0 0
        %1179 = vmatpush1.bf16.msra.mxu0 0
        %1180 = vmatprep.subr.bf16.mxu0 0
        %1181 = vmatpush1.bf16.msra.mxu0 0
        %1182 = vmatprep.subr.bf16.mxu0 0
        %1183 = vmatpush1.bf16.msra.mxu0 0
        %1184 = vmatprep.subr.bf16.mxu0 0
        %1185 = vmatpush1.bf16.msra.mxu0 0
        %1186 = vmatprep.mubr.bf16.mxu0 0
        %1187 = vmatmul.mubr.bf16.gmra.mrb[0].mxu0 %v1143
        %v1188 = vpop.f32.mrb[0].mxu0
        %v1189 = vadd.f32 0.0, %v1188
        %v1190 = vpop.f32.mrb[0].mxu0
        %v1191 = vpop.f32.mrb[0].mxu0
        %v1192 = vadd.f32 0.0, %v1191
        %v1193 = vpop.f32.mrb[0].mxu0
        %1194 = vmatprep.mubr.bf16.mxu0 0
        %1195 = vmatmul.mubr.bf16.gmra.mrb[0].mxu0 %v1146
        %v1196 = vpop.f32.mrb[0].mxu0
        %v1197 = vadd.f32 0.0, %v1196
        %v1198 = vpop.f32.mrb[0].mxu0
        %v1199 = vpop.f32.mrb[0].mxu0
        %v1200 = vadd.f32 0.0, %v1199
        %v1201 = vpop.f32.mrb[0].mxu0
        %1202 = vmatprep.mubr.bf16.mxu0 0
        %1203 = vmatmul.mubr.bf16.gmra.mrb[0].mxu0 %v1149
        %v1204 = vpop.f32.mrb[0].mxu0
        %v1205 = vadd.f32 0.0, %v1204
        %v1206 = vpop.f32.mrb[0].mxu0
        %v1207 = vpop.f32.mrb[0].mxu0
        %v1208 = vadd.f32 0.0, %v1207
        %v1209 = vpop.f32.mrb[0].mxu0
        %1210 = vmatprep.mubr.bf16.mxu0 0
        %1211 = vmatmul.mubr.bf16.gmra.mrb[0].mxu0 %v1152
        %v1212 = vpop.f32.mrb[0].mxu0
        %v1213 = vadd.f32 0.0, %v1212
        %v1214 = vpop.f32.mrb[0].mxu0
        %v1215 = vpop.f32.mrb[0].mxu0
        %v1216 = vadd.f32 0.0, %v1215
        %v1217 = vpop.f32.mrb[0].mxu0
        %1218 = vdwg.mxu0
        %1227 = vrot.lane.b32.xlu0 %v1189, 64
        %v1228 = vpop.permute.xlu0 %1227
        %1229 = vrot.lane.b32.xlu0 %v1192, 64
        %v1230 = vpop.permute.xlu0 %1229
        %1231 = vrot.lane.b32.xlu0 %v1197, 64
        %v1232 = vpop.permute.xlu0 %1231
        %1233 = vrot.lane.b32.xlu0 %v1200, 64
        %v1234 = vpop.permute.xlu0 %1233
        %1235 = vrot.lane.b32.xlu0 %v1205, 64
        %v1236 = vpop.permute.xlu0 %1235
        %1237 = vrot.lane.b32.xlu0 %v1208, 64
        %v1238 = vpop.permute.xlu0 %1237
        %1239 = vrot.lane.b32.xlu0 %v1213, 64
        %v1240 = vpop.permute.xlu0 %1239
        %1241 = vrot.lane.b32.xlu0 %v1216, 64
        %v1242 = vpop.permute.xlu0 %1241
        %v1251 = vadd.f32 %v969, %v1228
        %v1252 = vadd.f32 %v972, %v1230
        %v1253 = vadd.f32 %v977, %v1232
        %v1254 = vadd.f32 %v980, %v1234
        %v1255 = vadd.f32 %v985, %v1236
        %v1256 = vadd.f32 %v988, %v1238
        %v1257 = vadd.f32 %v993, %v1240
        %v1258 = vadd.f32 %v996, %v1242
        %v1259 = vld [vmem:[%s9] sm:$0x1]
        %v1261 = vlaneseq
        %v1262 = vshrl.u32 %v1261, 7
        %v1263 = vsub.s32 0, %v1262
        %v1264 = vrot.slane %v1259, %v1263
        %1265 = vrot.lane.b32.xlu0 %v1264, 64
        %v1266 = vpop.permute.xlu0 %1265
        %v1268 = vadd.f32 %v1251, %v1266
        %v1269 = vadd.f32 %v1252, %v1266
        %v1270 = vadd.f32 %v1253, %v1266
        %v1271 = vadd.f32 %v1254, %v1266
        %v1272 = vadd.f32 %v1255, %v1266
        %v1273 = vadd.f32 %v1256, %v1266
        %v1274 = vadd.f32 %v1257, %v1266
        %v1275 = vadd.f32 %v1258, %v1266
        %v1276 = vtanh.pop %v1268
        %v1277 = vtanh.pop %v1269
        %v1278 = vtanh.pop %v1270
        %v1279 = vtanh.pop %v1271
        %v1280 = vtanh.pop %v1272
        %v1281 = vtanh.pop %v1273
        %v1282 = vtanh.pop %v1274
        %v1283 = vtanh.pop %v1275
        %v1284 = vsub.f32 1.0, %v1047
        %v1285 = vsub.f32 1.0, %v1049
        %v1286 = vsub.f32 1.0, %v1051
        %v1287 = vsub.f32 1.0, %v1053
        %v1288 = vsub.f32 1.0, %v1055
        %v1289 = vsub.f32 1.0, %v1057
        %v1290 = vsub.f32 1.0, %v1059
        %v1291 = vsub.f32 1.0, %v1061
        %v1292 = vmul.f32 %v1284, %v1062
        %v1293 = vmul.f32 %v1285, %v1063
        %v1294 = vmul.f32 %v1286, %v1064
        %v1295 = vmul.f32 %v1287, %v1065
        %v1296 = vmul.f32 %v1288, %v1066
        %v1297 = vmul.f32 %v1289, %v1067
        %v1298 = vmul.f32 %v1290, %v1068
        %v1299 = vmul.f32 %v1291, %v1069
        %1308 = vrot.lane.b32.xlu0 %v1276, 64
        %v1309 = vpop.permute.xlu0 %1308
        %1310 = vrot.lane.b32.xlu0 %v1277, 64
        %v1311 = vpop.permute.xlu0 %1310
        %1312 = vrot.lane.b32.xlu0 %v1278, 64
        %v1313 = vpop.permute.xlu0 %1312
        %1314 = vrot.lane.b32.xlu0 %v1279, 64
        %v1315 = vpop.permute.xlu0 %1314
        %1316 = vrot.lane.b32.xlu0 %v1280, 64
        %v1317 = vpop.permute.xlu0 %1316
        %1318 = vrot.lane.b32.xlu0 %v1281, 64
        %v1319 = vpop.permute.xlu0 %1318
        %1320 = vrot.lane.b32.xlu0 %v1282, 64
        %v1321 = vpop.permute.xlu0 %1320
        %1322 = vrot.lane.b32.xlu0 %v1283, 64
        %v1323 = vpop.permute.xlu0 %1322
        %v1332 = vmul.f32 %v1047, %v1309
        %v1333 = vmul.f32 %v1049, %v1311
        %v1334 = vmul.f32 %v1051, %v1313
        %v1335 = vmul.f32 %v1053, %v1315
        %v1336 = vmul.f32 %v1055, %v1317
        %v1337 = vmul.f32 %v1057, %v1319
        %v1338 = vmul.f32 %v1059, %v1321
        %v1339 = vmul.f32 %v1061, %v1323
        %v1340 = vadd.f32 %v1292, %v1332
        %v1341 = vadd.f32 %v1293, %v1333
        %v1342 = vadd.f32 %v1294, %v1334
        %v1343 = vadd.f32 %v1295, %v1335
        %v1344 = vadd.f32 %v1296, %v1336
        %v1345 = vadd.f32 %v1297, %v1337
        %v1346 = vadd.f32 %v1298, %v1338
        %v1347 = vadd.f32 %v1299, %v1339
        %v1348 = vld [vmem:[%s10] sm:$0x1]
        %v1350 = vlaneseq
        %v1351 = vshrl.u32 %v1350, 7
        %v1352 = vsub.s32 0, %v1351
        %v1353 = vrot.slane %v1348, %v1352
        %1354 = vrot.lane.b32.xlu0 %v1353, 96
        %v1355 = vpop.permute.xlu0 %1354
        %v1357 = vadd.f32 %v969, %v1355
        %v1358 = vadd.f32 %v972, %v1355
        %v1359 = vadd.f32 %v977, %v1355
        %v1360 = vadd.f32 %v980, %v1355
        %v1361 = vadd.f32 %v985, %v1355
        %v1362 = vadd.f32 %v988, %v1355
        %v1363 = vadd.f32 %v993, %v1355
        %v1364 = vadd.f32 %v996, %v1355
        %vm1365 = vcmp.gt.f32.partialorder %v1357, 0.0
        %vm1366 = vcmp.gt.f32.partialorder %v1358, 0.0
        %vm1367 = vcmp.gt.f32.partialorder %v1359, 0.0
        %vm1368 = vcmp.gt.f32.partialorder %v1360, 0.0
        %vm1369 = vcmp.gt.f32.partialorder %v1361, 0.0
        %vm1370 = vcmp.gt.f32.partialorder %v1362, 0.0
        %vm1371 = vcmp.gt.f32.partialorder %v1363, 0.0
        %vm1372 = vcmp.gt.f32.partialorder %v1364, 0.0
        %v1373 = vmul.f32 %v1357, 0.01
        %v1374 = vmul.f32 %v1358, 0.01
        %v1375 = vmul.f32 %v1359, 0.01
        %v1376 = vmul.f32 %v1360, 0.01
        %v1377 = vmul.f32 %v1361, 0.01
        %v1378 = vmul.f32 %v1362, 0.01
        %v1379 = vmul.f32 %v1363, 0.01
        %v1380 = vmul.f32 %v1364, 0.01
        %v1381 = vsel %vm1365, %v1357, %v1373
        %v1382 = vsel %vm1366, %v1358, %v1374
        %v1383 = vsel %vm1367, %v1359, %v1375
        %v1384 = vsel %vm1368, %v1360, %v1376
        %v1385 = vsel %vm1369, %v1361, %v1377
        %v1386 = vsel %vm1370, %v1362, %v1378
        %v1387 = vsel %vm1371, %v1363, %v1379
        %v1388 = vsel %vm1372, %v1364, %v1380
        %v1389 = vld [vmem:[%s11] sm:$0x1]
        %v1391 = vlaneseq
        %v1392 = vshrl.u32 %v1391, 7
        %v1393 = vsub.s32 0, %v1392
        %v1394 = vrot.slane %v1389, %v1393
        %1395 = vrot.lane.b32.xlu0 %v1394, 96
        %v1396 = vpop.permute.xlu0 %1395
        %v1398 = vmul.f32 %v1381, %v1396
        %v1399 = vmul.f32 %v1382, %v1396
        %v1400 = vmul.f32 %v1383, %v1396
        %v1401 = vmul.f32 %v1384, %v1396
        %v1402 = vmul.f32 %v1385, %v1396
        %v1403 = vmul.f32 %v1386, %v1396
        %v1404 = vmul.f32 %v1387, %v1396
        %v1405 = vmul.f32 %v1388, %v1396
        %1414 = vrot.lane.b32.xlu0 %v1398, 32
        %v1415 = vpop.permute.xlu0 %1414
        %1416 = vrot.lane.b32.xlu0 %v1399, 32
        %v1417 = vpop.permute.xlu0 %1416
        %1418 = vrot.lane.b32.xlu0 %v1400, 32
        %v1419 = vpop.permute.xlu0 %1418
        %1420 = vrot.lane.b32.xlu0 %v1401, 32
        %v1421 = vpop.permute.xlu0 %1420
        %1422 = vrot.lane.b32.xlu0 %v1402, 32
        %v1423 = vpop.permute.xlu0 %1422
        %1424 = vrot.lane.b32.xlu0 %v1403, 32
        %v1425 = vpop.permute.xlu0 %1424
        %1426 = vrot.lane.b32.xlu0 %v1404, 32
        %v1427 = vpop.permute.xlu0 %1426
        %1428 = vrot.lane.b32.xlu0 %v1405, 32
        %v1429 = vpop.permute.xlu0 %1428
        %vm1438 = vcmask 130048
        %v1439 = vsel %vm1438, %v1415, 0.0
        %1440 = vadd.xlane.f32.xlu0 %v1439
        %v1441 = vpop.xlane.xlu0 %1440
        %v1442 = vsel %vm1438, %v1417, 0.0
        %1443 = vadd.xlane.f32.xlu0 %v1442
        %v1444 = vpop.xlane.xlu0 %1443
        %v1445 = vsel %vm1438, %v1419, 0.0
        %1446 = vadd.xlane.f32.xlu0 %v1445
        %v1447 = vpop.xlane.xlu0 %1446
        %v1448 = vsel %vm1438, %v1421, 0.0
        %1449 = vadd.xlane.f32.xlu0 %v1448
        %v1450 = vpop.xlane.xlu0 %1449
        %v1451 = vsel %vm1438, %v1423, 0.0
        %1452 = vadd.xlane.f32.xlu0 %v1451
        %v1453 = vpop.xlane.xlu0 %1452
        %v1454 = vsel %vm1438, %v1425, 0.0
        %1455 = vadd.xlane.f32.xlu0 %v1454
        %v1456 = vpop.xlane.xlu0 %1455
        %v1457 = vsel %vm1438, %v1427, 0.0
        %1458 = vadd.xlane.f32.xlu0 %v1457
        %v1459 = vpop.xlane.xlu0 %1458
        %v1460 = vsel %vm1438, %v1429, 0.0
        %1461 = vadd.xlane.f32.xlu0 %v1460
        %v1462 = vpop.xlane.xlu0 %1461
        %v1463 = vxor.u32 %v1441, 2147483648
        %v1464 = vxor.u32 %v1444, 2147483648
        %v1465 = vxor.u32 %v1447, 2147483648
        %v1466 = vxor.u32 %v1450, 2147483648
        %v1467 = vxor.u32 %v1453, 2147483648
        %v1468 = vxor.u32 %v1456, 2147483648
        %v1469 = vxor.u32 %v1459, 2147483648
        %v1470 = vxor.u32 %v1462, 2147483648
        %v1471 = vmul.f32 %v1463, 1.442695
        %v1472 = vpow.pop %v1471
        %v1473 = vmul.f32 %v1464, 1.442695
        %v1474 = vpow.pop %v1473
        %v1475 = vmul.f32 %v1465, 1.442695
        %v1476 = vpow.pop %v1475
        %v1477 = vmul.f32 %v1466, 1.442695
        %v1478 = vpow.pop %v1477
        %v1479 = vmul.f32 %v1467, 1.442695
        %v1480 = vpow.pop %v1479
        %v1481 = vmul.f32 %v1468, 1.442695
        %v1482 = vpow.pop %v1481
        %v1483 = vmul.f32 %v1469, 1.442695
        %v1484 = vpow.pop %v1483
        %v1485 = vmul.f32 %v1470, 1.442695
        %v1486 = vpow.pop %v1485
        %v1487 = vadd.f32 %v1472, 1.0
        %v1488 = vadd.f32 %v1474, 1.0
        %v1489 = vadd.f32 %v1476, 1.0
        %v1490 = vadd.f32 %v1478, 1.0
        %v1491 = vadd.f32 %v1480, 1.0
        %v1492 = vadd.f32 %v1482, 1.0
        %v1493 = vadd.f32 %v1484, 1.0
        %v1494 = vadd.f32 %v1486, 1.0
        %v1495 = vrcp.pop %v1487
        %v1496 = vmul.f32 1.0, %v1495
        %v1497 = vrcp.pop %v1488
        %v1498 = vmul.f32 1.0, %v1497
        %v1499 = vrcp.pop %v1489
        %v1500 = vmul.f32 1.0, %v1499
        %v1501 = vrcp.pop %v1490
        %v1502 = vmul.f32 1.0, %v1501
        %v1503 = vrcp.pop %v1491
        %v1504 = vmul.f32 1.0, %v1503
        %v1505 = vrcp.pop %v1492
        %v1506 = vmul.f32 1.0, %v1505
        %v1507 = vrcp.pop %v1493
        %v1508 = vmul.f32 1.0, %v1507
        %v1509 = vrcp.pop %v1494
        %v1510 = vmul.f32 1.0, %v1509
        %v1511 = vmul.f32 %v1496, %v1340
        %v1512 = vmul.f32 %v1498, %v1341
        %v1513 = vmul.f32 %v1500, %v1342
        %v1514 = vmul.f32 %v1502, %v1343
        %v1515 = vmul.f32 %v1504, %v1344
        %v1516 = vmul.f32 %v1506, %v1345
        %v1517 = vmul.f32 %v1508, %v1346
        %v1518 = vmul.f32 %v1510, %v1347
        %v1519 = vsel %vm715, %v1511, 1.0
        %v1520 = vsel %vm715, %v1512, 1.0
        %v1521 = vsel %vm715, %v1513, 1.0
        %v1522 = vsel %vm715, %v1514, 1.0
        %v1523 = vsel %vm715, %v1515, 1.0
        %v1524 = vsel %vm715, %v1516, 1.0
        %v1525 = vsel %vm715, %v1517, 1.0
        %v1526 = vsel %vm715, %v1518, 1.0
        %vm1527 = vcmask 269312
        %v1528 = vsel %vm1527, %v1519, 0.0
        %v1529 = vsel %vm1527, %v1520, 0.0
        %v1530 = vsel %vm1527, %v1521, 0.0
        %v1531 = vsel %vm1527, %v1522, 0.0
        %v1532 = vsel %vm1527, %v1523, 0.0
        %v1533 = vsel %vm1527, %v1524, 0.0
        %v1534 = vsel %vm1527, %v1525, 0.0
        %v1535 = vsel %vm1527, %v1526, 0.0
        %v1536 = vpack.c.bf16 %v1529, %v1528
        %v1537 = vpack.c.bf16 %v1531, %v1530
        %v1538 = vpack.c.bf16 %v1533, %v1532
        %v1539 = vpack.c.bf16 %v1535, %v1534
        %s1540 = smul.u32 %s30, 128
        %v1541 = vlaneseq
        %v1542 = vand.u32 %v1541, 127
        %v1543 = vstv %s1540
        %v1544 = vadd.s32 %v1543, %v1542
        %v1545 = vld [vmem:[%s515] sm:$0xff]
        %v1546 = vld [vmem:[%s515 + $0x8] sm:$0xff]
        %v1547 = vld [vmem:[%s515 + $0x10] sm:$0xff]
        %v1548 = vld [vmem:[%s515 + $0x18] sm:$0xff]
        %v1549 = vld [vmem:[%s515 + $0x20] sm:$0xff]
        %v1550 = vld [vmem:[%s515 + $0x28] sm:$0xff]
        %v1551 = vld [vmem:[%s515 + $0x30] sm:$0xff]
        %v1552 = vld [vmem:[%s515 + $0x38] sm:$0xff]
        %1553 = vset.pattern.permute.xlu0 0
        %1554 = vperm.xlu0 %1553, %v1545
        %v1555 = vpop.permute.xlu0 %1554
        %1556 = vset.pattern.permute.xlu0 0
        %1557 = vperm.xlu0 %1556, %v1546
        %v1558 = vpop.permute.xlu0 %1557
        %1559 = vset.pattern.permute.xlu0 0
        %1560 = vperm.xlu0 %1559, %v1547
        %v1561 = vpop.permute.xlu0 %1560
        %1562 = vset.pattern.permute.xlu0 0
        %1563 = vperm.xlu0 %1562, %v1548
        %v1564 = vpop.permute.xlu0 %1563
        %1565 = vset.pattern.permute.xlu0 0
        %1566 = vperm.xlu0 %1565, %v1549
        %v1567 = vpop.permute.xlu0 %1566
        %1568 = vset.pattern.permute.xlu0 0
        %1569 = vperm.xlu0 %1568, %v1550
        %v1570 = vpop.permute.xlu0 %1569
        %1571 = vset.pattern.permute.xlu0 0
        %1572 = vperm.xlu0 %1571, %v1551
        %v1573 = vpop.permute.xlu0 %1572
        %1574 = vset.pattern.permute.xlu0 0
        %1575 = vperm.xlu0 %1574, %v1552
        %v1576 = vpop.permute.xlu0 %1575
        %vm1577 = vcmp.eq.s32.totalorder %v1555, %v1544
        %vm1578 = vcmp.eq.s32.totalorder %v1558, %v1544
        %vm1579 = vcmp.eq.s32.totalorder %v1561, %v1544
        %vm1580 = vcmp.eq.s32.totalorder %v1564, %v1544
        %vm1581 = vcmp.eq.s32.totalorder %v1567, %v1544
        %vm1582 = vcmp.eq.s32.totalorder %v1570, %v1544
        %vm1583 = vcmp.eq.s32.totalorder %v1573, %v1544
        %vm1584 = vcmp.eq.s32.totalorder %v1576, %v1544
        %v1585 = vsel %vm1577, 1, 0
        %v1586 = vsel %vm1578, 1, 0
        %v1587 = vsel %vm1579, 1, 0
        %v1588 = vsel %vm1580, 1, 0
        %v1589 = vsel %vm1581, 1, 0
        %v1590 = vsel %vm1582, 1, 0
        %v1591 = vsel %vm1583, 1, 0
        %v1592 = vsel %vm1584, 1, 0
        %v1593 = vcvt.s32.f32 %v1585
        %v1594 = vcvt.s32.f32 %v1586
        %v1595 = vcvt.s32.f32 %v1587
        %v1596 = vcvt.s32.f32 %v1588
        %v1597 = vcvt.s32.f32 %v1589
        %v1598 = vcvt.s32.f32 %v1590
        %v1599 = vcvt.s32.f32 %v1591
        %v1600 = vcvt.s32.f32 %v1592
        %v1601 = vpack.c.bf16 %v1594, %v1593
        %v1602 = vpack.c.bf16 %v1596, %v1595
        %v1603 = vpack.c.bf16 %v1598, %v1597
        %v1604 = vpack.c.bf16 %v1600, %v1599
        %1605 = vxpose.xlu0.c.b16.start [1/8] %v1601, 128
        %1606 = vxpose.xlu0.c.b16.cont [2/8] %v1602, 128
        %1607 = vxpose.xlu0.c.b16.cont [3/8] %v1603, 128
        %1608 = vxpose.xlu0.c.b16.cont [4/8] %v1604, 128
        %1609 = vxpose.xlu0.c.b16.cont [5/8] 0, 128
        %1610 = vxpose.xlu0.c.b16.cont [6/8] 0, 128
        %1611 = vxpose.xlu0.c.b16.cont [7/8] 0, 128
        %1612 = vxpose.xlu0.c.b16.end [8/8] 0, 128
        %v1613 = vpop.trf.xlu0
        %v1614 = vpop.trf.xlu0
        %v1615 = vpop.trf.xlu0
        %v1616 = vpop.trf.xlu0
        %v1617 = vpop.trf.xlu0
        %v1618 = vpop.trf.xlu0
        %v1619 = vpop.trf.xlu0
        %v1620 = vpop.trf.xlu0
        %vm1621 = vcmask 523264
        %v1623 = vsel %vm1621, %v1613, 0
        %v1626 = vsel %vm1621, %v1614, 0
        %v1629 = vsel %vm1621, %v1615, 0
        %v1632 = vsel %vm1621, %v1616, 0
        %v1635 = vsel %vm1621, %v1617, 0
        %v1638 = vsel %vm1621, %v1618, 0
        %v1641 = vsel %vm1621, %v1619, 0
        %v1644 = vsel %vm1621, %v1620, 0
        %1646 = vmatprep.subr.bf16.mxu0 0
        %1647 = vmatpush1.bf16.msra.mxu0 %v1536
        %1648 = vmatprep.subr.bf16.mxu0 0
        %1649 = vmatpush1.bf16.msra.mxu0 %v1537
        %1650 = vmatprep.subr.bf16.mxu0 0
        %1651 = vmatpush1.bf16.msra.mxu0 %v1538
        %1652 = vmatprep.subr.bf16.mxu0 0
        %1653 = vmatpush1.bf16.msra.mxu0 %v1539
        %1654 = vmatprep.subr.bf16.mxu0 0
        %1655 = vmatpush1.bf16.msra.mxu0 0
        %1656 = vmatprep.subr.bf16.mxu0 0
        %1657 = vmatpush1.bf16.msra.mxu0 0
        %1658 = vmatprep.subr.bf16.mxu0 0
        %1659 = vmatpush1.bf16.msra.mxu0 0
        %1660 = vmatprep.subr.bf16.mxu0 0
        %1661 = vmatpush1.bf16.msra.mxu0 0
        %1662 = vmatprep.subr.bf16.mxu0 0
        %1663 = vmatpush1.bf16.msra.mxu0 0
        %1664 = vmatprep.subr.bf16.mxu0 0
        %1665 = vmatpush1.bf16.msra.mxu0 0
        %1666 = vmatprep.subr.bf16.mxu0 0
        %1667 = vmatpush1.bf16.msra.mxu0 0
        %1668 = vmatprep.subr.bf16.mxu0 0
        %1669 = vmatpush1.bf16.msra.mxu0 0
        %1670 = vmatprep.subr.bf16.mxu0 0
        %1671 = vmatpush1.bf16.msra.mxu0 0
        %1672 = vmatprep.subr.bf16.mxu0 0
        %1673 = vmatpush1.bf16.msra.mxu0 0
        %1674 = vmatprep.subr.bf16.mxu0 0
        %1675 = vmatpush1.bf16.msra.mxu0 0
        %1676 = vmatprep.subr.bf16.mxu0 0
        %1677 = vmatpush1.bf16.msra.mxu0 0
        %1678 = vmatprep.mubr.bf16.mxu0 0
        %1679 = vmatmul.mubr.bf16.gmra.mrb[0].mxu0 %v1623
        %v1680 = vpop.f32.mrb[0].mxu0
        %v1681 = vadd.f32 0.0, %v1680
        %v1682 = vpop.f32.mrb[0].mxu0
        %v1683 = vpop.f32.mrb[0].mxu0
        %v1684 = vadd.f32 0.0, %v1683
        %v1685 = vpop.f32.mrb[0].mxu0
        %1686 = vmatprep.mubr.bf16.mxu0 0
        %1687 = vmatmul.mubr.bf16.gmra.mrb[0].mxu0 %v1626
        %v1688 = vpop.f32.mrb[0].mxu0
        %v1689 = vadd.f32 0.0, %v1688
        %v1690 = vpop.f32.mrb[0].mxu0
        %v1691 = vpop.f32.mrb[0].mxu0
        %v1692 = vadd.f32 0.0, %v1691
        %v1693 = vpop.f32.mrb[0].mxu0
        %1694 = vmatprep.mubr.bf16.mxu0 0
        %1695 = vmatmul.mubr.bf16.gmra.mrb[0].mxu0 %v1629
        %v1696 = vpop.f32.mrb[0].mxu0
        %v1697 = vadd.f32 0.0, %v1696
        %v1698 = vpop.f32.mrb[0].mxu0
        %v1699 = vpop.f32.mrb[0].mxu0
        %v1700 = vadd.f32 0.0, %v1699
        %v1701 = vpop.f32.mrb[0].mxu0
        %1702 = vmatprep.mubr.bf16.mxu0 0
        %1703 = vmatmul.mubr.bf16.gmra.mrb[0].mxu0 %v1632
        %v1704 = vpop.f32.mrb[0].mxu0
        %v1705 = vadd.f32 0.0, %v1704
        %v1706 = vpop.f32.mrb[0].mxu0
        %v1707 = vpop.f32.mrb[0].mxu0
        %v1708 = vadd.f32 0.0, %v1707
        %v1709 = vpop.f32.mrb[0].mxu0
        %1710 = vmatprep.mubr.bf16.mxu0 0
        %1711 = vmatmul.mubr.bf16.gmra.mrb[0].mxu0 %v1635
        %v1712 = vpop.f32.mrb[0].mxu0
        %v1713 = vadd.f32 0.0, %v1712
        %v1714 = vpop.f32.mrb[0].mxu0
        %v1715 = vpop.f32.mrb[0].mxu0
        %v1716 = vadd.f32 0.0, %v1715
        %v1717 = vpop.f32.mrb[0].mxu0
        %1718 = vmatprep.mubr.bf16.mxu0 0
        %1719 = vmatmul.mubr.bf16.gmra.mrb[0].mxu0 %v1638
        %v1720 = vpop.f32.mrb[0].mxu0
        %v1721 = vadd.f32 0.0, %v1720
        %v1722 = vpop.f32.mrb[0].mxu0
        %v1723 = vpop.f32.mrb[0].mxu0
        %v1724 = vadd.f32 0.0, %v1723
        %v1725 = vpop.f32.mrb[0].mxu0
        %1726 = vmatprep.mubr.bf16.mxu0 0
        %1727 = vmatmul.mubr.bf16.gmra.mrb[0].mxu0 %v1641
        %v1728 = vpop.f32.mrb[0].mxu0
        %v1729 = vadd.f32 0.0, %v1728
        %v1730 = vpop.f32.mrb[0].mxu0
        %v1731 = vpop.f32.mrb[0].mxu0
        %v1732 = vadd.f32 0.0, %v1731
        %v1733 = vpop.f32.mrb[0].mxu0
        %1734 = vmatprep.mubr.bf16.mxu0 0
        %1735 = vmatmul.mubr.bf16.gmra.mrb[0].mxu0 %v1644
        %v1736 = vpop.f32.mrb[0].mxu0
        %v1737 = vadd.f32 0.0, %v1736
        %v1738 = vpop.f32.mrb[0].mxu0
        %v1739 = vpop.f32.mrb[0].mxu0
        %v1740 = vadd.f32 0.0, %v1739
        %v1741 = vpop.f32.mrb[0].mxu0
        %1742 = vdwg.mxu0
        %p1743 = scmp.eq.s32.totalorder %s31, 0
        // Predicated region
        $region77: #{tpu_custom_call.1} parent=75 // pred_check
          %p1744 = pneg %p1743
        $region78: #{tpu_custom_call.1} parent=75 // pred_check_branch
          %1746 = sbr.rel (%p1744) target = $region80
        $region79: #{tpu_custom_call.1} parent=75 // pred_region
          %1747 = vst [vmem:[#allocation2] sm:$0xff] %v1681
          %1748 = vst [vmem:[#allocation2 + $0x8] sm:$0xff] %v1684
          %1749 = vst [vmem:[#allocation2 + $0x10] sm:$0xff] %v1689
          %1750 = vst [vmem:[#allocation2 + $0x18] sm:$0xff] %v1692
          %1751 = vst [vmem:[#allocation2 + $0x20] sm:$0xff] %v1697
          %1752 = vst [vmem:[#allocation2 + $0x28] sm:$0xff] %v1700
          %1753 = vst [vmem:[#allocation2 + $0x30] sm:$0xff] %v1705
          %1754 = vst [vmem:[#allocation2 + $0x38] sm:$0xff] %v1708
          %1755 = vst [vmem:[#allocation2 + $0x40] sm:$0xff] %v1713
          %1756 = vst [vmem:[#allocation2 + $0x48] sm:$0xff] %v1716
          %1757 = vst [vmem:[#allocation2 + $0x50] sm:$0xff] %v1721
          %1758 = vst [vmem:[#allocation2 + $0x58] sm:$0xff] %v1724
          %1759 = vst [vmem:[#allocation2 + $0x60] sm:$0xff] %v1729
          %1760 = vst [vmem:[#allocation2 + $0x68] sm:$0xff] %v1732
          %1761 = vst [vmem:[#allocation2 + $0x70] sm:$0xff] %v1737
          %1762 = vst [vmem:[#allocation2 + $0x78] sm:$0xff] %v1740
        $region80: #{tpu_custom_call.1} parent=75 // pred_fallthru
          _
        %p1763 = scmp.ne.s32.totalorder %s31, 0
        // Predicated region
        $region81: #{tpu_custom_call.1} parent=75 // pred_check
          %p1764 = pneg %p1763
        $region82: #{tpu_custom_call.1} parent=75 // pred_check_branch
          %1766 = sbr.rel (%p1764) target = $region84
        $region83: #{tpu_custom_call.1} parent=75 // pred_region
          %v1767 = vld [vmem:[#allocation2] sm:$0xff]
          %v1768 = vld [vmem:[#allocation2 + $0x8] sm:$0xff]
          %v1769 = vld [vmem:[#allocation2 + $0x10] sm:$0xff]
          %v1770 = vld [vmem:[#allocation2 + $0x18] sm:$0xff]
          %v1771 = vld [vmem:[#allocation2 + $0x20] sm:$0xff]
          %v1772 = vld [vmem:[#allocation2 + $0x28] sm:$0xff]
          %v1773 = vld [vmem:[#allocation2 + $0x30] sm:$0xff]
          %v1774 = vld [vmem:[#allocation2 + $0x38] sm:$0xff]
          %v1775 = vld [vmem:[#allocation2 + $0x40] sm:$0xff]
          %v1776 = vld [vmem:[#allocation2 + $0x48] sm:$0xff]
          %v1777 = vld [vmem:[#allocation2 + $0x50] sm:$0xff]
          %v1778 = vld [vmem:[#allocation2 + $0x58] sm:$0xff]
          %v1779 = vld [vmem:[#allocation2 + $0x60] sm:$0xff]
          %v1780 = vld [vmem:[#allocation2 + $0x68] sm:$0xff]
          %v1781 = vld [vmem:[#allocation2 + $0x70] sm:$0xff]
          %v1782 = vld [vmem:[#allocation2 + $0x78] sm:$0xff]
          %v1783 = vadd.f32 %v1767, %v1681
          %v1784 = vadd.f32 %v1768, %v1684
          %v1785 = vadd.f32 %v1769, %v1689
          %v1786 = vadd.f32 %v1770, %v1692
          %v1787 = vadd.f32 %v1771, %v1697
          %v1788 = vadd.f32 %v1772, %v1700
          %v1789 = vadd.f32 %v1773, %v1705
          %v1790 = vadd.f32 %v1774, %v1708
          %v1791 = vadd.f32 %v1775, %v1713
          %v1792 = vadd.f32 %v1776, %v1716
          %v1793 = vadd.f32 %v1777, %v1721
          %v1794 = vadd.f32 %v1778, %v1724
          %v1795 = vadd.f32 %v1779, %v1729
          %v1796 = vadd.f32 %v1780, %v1732
          %v1797 = vadd.f32 %v1781, %v1737
          %v1798 = vadd.f32 %v1782, %v1740
          %1799 = vst [vmem:[#allocation2] sm:$0xff] %v1783
          %1800 = vst [vmem:[#allocation2 + $0x8] sm:$0xff] %v1784
          %1801 = vst [vmem:[#allocation2 + $0x10] sm:$0xff] %v1785
          %1802 = vst [vmem:[#allocation2 + $0x18] sm:$0xff] %v1786
          %1803 = vst [vmem:[#allocation2 + $0x20] sm:$0xff] %v1787
          %1804 = vst [vmem:[#allocation2 + $0x28] sm:$0xff] %v1788
          %1805 = vst [vmem:[#allocation2 + $0x30] sm:$0xff] %v1789
          %1806 = vst [vmem:[#allocation2 + $0x38] sm:$0xff] %v1790
          %1807 = vst [vmem:[#allocation2 + $0x40] sm:$0xff] %v1791
          %1808 = vst [vmem:[#allocation2 + $0x48] sm:$0xff] %v1792
          %1809 = vst [vmem:[#allocation2 + $0x50] sm:$0xff] %v1793
          %1810 = vst [vmem:[#allocation2 + $0x58] sm:$0xff] %v1794
          %1811 = vst [vmem:[#allocation2 + $0x60] sm:$0xff] %v1795
          %1812 = vst [vmem:[#allocation2 + $0x68] sm:$0xff] %v1796
          %1813 = vst [vmem:[#allocation2 + $0x70] sm:$0xff] %v1797
          %1814 = vst [vmem:[#allocation2 + $0x78] sm:$0xff] %v1798
        $region84: #{tpu_custom_call.1} parent=75 // pred_fallthru
          _
        %p1815 = scmp.eq.s32.totalorder %s31, 3
        // Predicated region
        $region85: #{tpu_custom_call.1} parent=75 // pred_check
          %p1816 = pneg %p1815
        $region86: #{tpu_custom_call.1} parent=75 // pred_check_branch
          %1818 = sbr.rel (%p1816) target = $region88
        $region87: #{tpu_custom_call.1} parent=75 // pred_region
          %v1819 = vld [vmem:[#allocation2] sm:$0xff]
          %v1820 = vld [vmem:[#allocation2 + $0x8] sm:$0xff]
          %v1821 = vld [vmem:[#allocation2 + $0x10] sm:$0xff]
          %v1822 = vld [vmem:[#allocation2 + $0x18] sm:$0xff]
          %v1823 = vld [vmem:[#allocation2 + $0x20] sm:$0xff]
          %v1824 = vld [vmem:[#allocation2 + $0x28] sm:$0xff]
          %v1825 = vld [vmem:[#allocation2 + $0x30] sm:$0xff]
          %v1826 = vld [vmem:[#allocation2 + $0x38] sm:$0xff]
          %v1827 = vld [vmem:[#allocation2 + $0x40] sm:$0xff]
          %v1828 = vld [vmem:[#allocation2 + $0x48] sm:$0xff]
          %v1829 = vld [vmem:[#allocation2 + $0x50] sm:$0xff]
          %v1830 = vld [vmem:[#allocation2 + $0x58] sm:$0xff]
          %v1831 = vld [vmem:[#allocation2 + $0x60] sm:$0xff]
          %v1832 = vld [vmem:[#allocation2 + $0x68] sm:$0xff]
          %v1833 = vld [vmem:[#allocation2 + $0x70] sm:$0xff]
          %v1834 = vld [vmem:[#allocation2 + $0x78] sm:$0xff]
          %v1835 = vadd.f32 %v1819, 0.0001
          %v1836 = vadd.f32 %v1820, 0.0001
          %v1837 = vadd.f32 %v1821, 0.0001
          %v1838 = vadd.f32 %v1822, 0.0001
          %v1839 = vadd.f32 %v1823, 0.0001
          %v1840 = vadd.f32 %v1824, 0.0001
          %v1841 = vadd.f32 %v1825, 0.0001
          %v1842 = vadd.f32 %v1826, 0.0001
          %v1843 = vadd.f32 %v1827, 0.0001
          %v1844 = vadd.f32 %v1828, 0.0001
          %v1845 = vadd.f32 %v1829, 0.0001
          %v1846 = vadd.f32 %v1830, 0.0001
          %v1847 = vadd.f32 %v1831, 0.0001
          %v1848 = vadd.f32 %v1832, 0.0001
          %v1849 = vadd.f32 %v1833, 0.0001
          %v1850 = vadd.f32 %v1834, 0.0001
          %v1851 = vrsqrt.pop %v1835
          %v1852 = vrsqrt.pop %v1836
          %v1853 = vrsqrt.pop %v1837
          %v1854 = vrsqrt.pop %v1838
          %v1855 = vrsqrt.pop %v1839
          %v1856 = vrsqrt.pop %v1840
          %v1857 = vrsqrt.pop %v1841
          %v1858 = vrsqrt.pop %v1842
          %v1859 = vrsqrt.pop %v1843
          %v1860 = vrsqrt.pop %v1844
          %v1861 = vrsqrt.pop %v1845
          %v1862 = vrsqrt.pop %v1846
          %v1863 = vrsqrt.pop %v1847
          %v1864 = vrsqrt.pop %v1848
          %v1865 = vrsqrt.pop %v1849
          %v1866 = vrsqrt.pop %v1850
          %1868 = vset.pattern.permute.xlu0 32
          %1869 = vperm.xlu0 %1868, %v1851
          %v1870 = vpop.permute.xlu0 %1869
          %1873 = vset.pattern.permute.xlu0 32
          %1874 = vperm.xlu0 %1873, %v1852
          %v1875 = vpop.permute.xlu0 %1874
          %1878 = vset.pattern.permute.xlu0 32
          %1879 = vperm.xlu0 %1878, %v1853
          %v1880 = vpop.permute.xlu0 %1879
          %1883 = vset.pattern.permute.xlu0 32
          %1884 = vperm.xlu0 %1883, %v1854
          %v1885 = vpop.permute.xlu0 %1884
          %1888 = vset.pattern.permute.xlu0 32
          %1889 = vperm.xlu0 %1888, %v1855
          %v1890 = vpop.permute.xlu0 %1889
          %1893 = vset.pattern.permute.xlu0 32
          %1894 = vperm.xlu0 %1893, %v1856
          %v1895 = vpop.permute.xlu0 %1894
          %1898 = vset.pattern.permute.xlu0 32
          %1899 = vperm.xlu0 %1898, %v1857
          %v1900 = vpop.permute.xlu0 %1899
          %1903 = vset.pattern.permute.xlu0 32
          %1904 = vperm.xlu0 %1903, %v1858
          %v1905 = vpop.permute.xlu0 %1904
          %1908 = vset.pattern.permute.xlu0 32
          %1909 = vperm.xlu0 %1908, %v1859
          %v1910 = vpop.permute.xlu0 %1909
          %1913 = vset.pattern.permute.xlu0 32
          %1914 = vperm.xlu0 %1913, %v1860
          %v1915 = vpop.permute.xlu0 %1914
          %1918 = vset.pattern.permute.xlu0 32
          %1919 = vperm.xlu0 %1918, %v1861
          %v1920 = vpop.permute.xlu0 %1919
          %1923 = vset.pattern.permute.xlu0 32
          %1924 = vperm.xlu0 %1923, %v1862
          %v1925 = vpop.permute.xlu0 %1924
          %1928 = vset.pattern.permute.xlu0 32
          %1929 = vperm.xlu0 %1928, %v1863
          %v1930 = vpop.permute.xlu0 %1929
          %1933 = vset.pattern.permute.xlu0 32
          %1934 = vperm.xlu0 %1933, %v1864
          %v1935 = vpop.permute.xlu0 %1934
          %1938 = vset.pattern.permute.xlu0 32
          %1939 = vperm.xlu0 %1938, %v1865
          %v1940 = vpop.permute.xlu0 %1939
          %1943 = vset.pattern.permute.xlu0 32
          %1944 = vperm.xlu0 %1943, %v1866
          %v1945 = vpop.permute.xlu0 %1944
          %v1947 = vmul.f32 %v1819, %v1870
          %v1948 = vmul.f32 %v1820, %v1875
          %v1949 = vmul.f32 %v1821, %v1880
          %v1950 = vmul.f32 %v1822, %v1885
          %v1951 = vmul.f32 %v1823, %v1890
          %v1952 = vmul.f32 %v1824, %v1895
          %v1953 = vmul.f32 %v1825, %v1900
          %v1954 = vmul.f32 %v1826, %v1905
          %v1955 = vmul.f32 %v1827, %v1910
          %v1956 = vmul.f32 %v1828, %v1915
          %v1957 = vmul.f32 %v1829, %v1920
          %v1958 = vmul.f32 %v1830, %v1925
          %v1959 = vmul.f32 %v1831, %v1930
          %v1960 = vmul.f32 %v1832, %v1935
          %v1961 = vmul.f32 %v1833, %v1940
          %v1962 = vmul.f32 %v1834, %v1945
          %v1963 = vpack.c.bf16 %v1948, %v1947
          %v1964 = vpack.c.bf16 %v1950, %v1949
          %v1965 = vpack.c.bf16 %v1952, %v1951
          %v1966 = vpack.c.bf16 %v1954, %v1953
          %v1967 = vpack.c.bf16 %v1956, %v1955
          %v1968 = vpack.c.bf16 %v1958, %v1957
          %v1969 = vpack.c.bf16 %v1960, %v1959
          %v1970 = vpack.c.bf16 %v1962, %v1961
          %v1971 = vld [vmem:[%s13] sm:$0xf]
          %v1972 = vld [vmem:[%s13 + $0x4] sm:$0xf]
          %v1973 = vld [vmem:[%s13 + $0x8] sm:$0xf]
          %v1974 = vld [vmem:[%s13 + $0xc] sm:$0xf]
          %v1979 = vunpack.c.l.b16 %v1971
          %v1980 = vunpack.c.l.b16 %v1972
          %v1981 = vunpack.c.l.b16 %v1973
          %v1982 = vunpack.c.l.b16 %v1974
          %v1983 = vpack.c.b16 %v1980, %v1979
          %v1984 = vpack.c.b16 %v1982, %v1981
          %v1988 = vsel %vm715, %v1963, 0
          %v1991 = vsel %vm715, %v1964, 0
          %v1994 = vsel %vm715, %v1965, 0
          %v1997 = vsel %vm715, %v1966, 0
          %v2000 = vsel %vm715, %v1967, 0
          %v2003 = vsel %vm715, %v1968, 0
          %v2006 = vsel %vm715, %v1969, 0
          %v2009 = vsel %vm715, %v1970, 0
          %2011 = vmatprep.subr.bf16.mxu0 0
          %2012 = vmatpush1.bf16.msra.mxu0 %v1983
          %2013 = vmatprep.subr.bf16.mxu0 0
          %2014 = vmatpush1.bf16.msra.mxu0 %v1984
          %2015 = vmatprep.subr.bf16.mxu0 0
          %2016 = vmatpush1.bf16.msra.mxu0 0
          %2017 = vmatprep.subr.bf16.mxu0 0
          %2018 = vmatpush1.bf16.msra.mxu0 0
          %2019 = vmatprep.subr.bf16.mxu0 0
          %2020 = vmatpush1.bf16.msra.mxu0 0
          %2021 = vmatprep.subr.bf16.mxu0 0
          %2022 = vmatpush1.bf16.msra.mxu0 0
          %2023 = vmatprep.subr.bf16.mxu0 0
          %2024 = vmatpush1.bf16.msra.mxu0 0
          %2025 = vmatprep.subr.bf16.mxu0 0
          %2026 = vmatpush1.bf16.msra.mxu0 0
          %2027 = vmatprep.subr.bf16.mxu0 0
          %2028 = vmatpush1.bf16.msra.mxu0 0
          %2029 = vmatprep.subr.bf16.mxu0 0
          %2030 = vmatpush1.bf16.msra.mxu0 0
          %2031 = vmatprep.subr.bf16.mxu0 0
          %2032 = vmatpush1.bf16.msra.mxu0 0
          %2033 = vmatprep.subr.bf16.mxu0 0
          %2034 = vmatpush1.bf16.msra.mxu0 0
          %2035 = vmatprep.subr.bf16.mxu0 0
          %2036 = vmatpush1.bf16.msra.mxu0 0
          %2037 = vmatprep.subr.bf16.mxu0 0
          %2038 = vmatpush1.bf16.msra.mxu0 0
          %2039 = vmatprep.subr.bf16.mxu0 0
          %2040 = vmatpush1.bf16.msra.mxu0 0
          %2041 = vmatprep.subr.bf16.mxu0 0
          %2042 = vmatpush1.bf16.msra.mxu0 0
          %2043 = vmatprep.mubr.bf16.mxu0 0
          %2044 = vmatmul.mubr.bf16.gmra.mrb[0].mxu0 %v1988
          %v2045 = vpop.f32.mrb[0].mxu0
          %v2046 = vadd.f32 0.0, %v2045
          %v2047 = vpop.f32.mrb[0].mxu0
          %v2048 = vpop.f32.mrb[0].mxu0
          %v2049 = vadd.f32 0.0, %v2048
          %v2050 = vpop.f32.mrb[0].mxu0
          %2051 = vmatprep.mubr.bf16.mxu0 0
          %2052 = vmatmul.mubr.bf16.gmra.mrb[0].mxu0 %v1991
          %v2053 = vpop.f32.mrb[0].mxu0
          %v2054 = vadd.f32 0.0, %v2053
          %v2055 = vpop.f32.mrb[0].mxu0
          %v2056 = vpop.f32.mrb[0].mxu0
          %v2057 = vadd.f32 0.0, %v2056
          %v2058 = vpop.f32.mrb[0].mxu0
          %2059 = vmatprep.mubr.bf16.mxu0 0
          %2060 = vmatmul.mubr.bf16.gmra.mrb[0].mxu0 %v1994
          %v2061 = vpop.f32.mrb[0].mxu0
          %v2062 = vadd.f32 0.0, %v2061
          %v2063 = vpop.f32.mrb[0].mxu0
          %v2064 = vpop.f32.mrb[0].mxu0
          %v2065 = vadd.f32 0.0, %v2064
          %v2066 = vpop.f32.mrb[0].mxu0
          %2067 = vmatprep.mubr.bf16.mxu0 0
          %2068 = vmatmul.mubr.bf16.gmra.mrb[0].mxu0 %v1997
          %v2069 = vpop.f32.mrb[0].mxu0
          %v2070 = vadd.f32 0.0, %v2069
          %v2071 = vpop.f32.mrb[0].mxu0
          %v2072 = vpop.f32.mrb[0].mxu0
          %v2073 = vadd.f32 0.0, %v2072
          %v2074 = vpop.f32.mrb[0].mxu0
          %2075 = vmatprep.mubr.bf16.mxu0 0
          %2076 = vmatmul.mubr.bf16.gmra.mrb[0].mxu0 %v2000
          %v2077 = vpop.f32.mrb[0].mxu0
          %v2078 = vadd.f32 0.0, %v2077
          %v2079 = vpop.f32.mrb[0].mxu0
          %v2080 = vpop.f32.mrb[0].mxu0
          %v2081 = vadd.f32 0.0, %v2080
          %v2082 = vpop.f32.mrb[0].mxu0
          %2083 = vmatprep.mubr.bf16.mxu0 0
          %2084 = vmatmul.mubr.bf16.gmra.mrb[0].mxu0 %v2003
          %v2085 = vpop.f32.mrb[0].mxu0
          %v2086 = vadd.f32 0.0, %v2085
          %v2087 = vpop.f32.mrb[0].mxu0
          %v2088 = vpop.f32.mrb[0].mxu0
          %v2089 = vadd.f32 0.0, %v2088
          %v2090 = vpop.f32.mrb[0].mxu0
          %2091 = vmatprep.mubr.bf16.mxu0 0
          %2092 = vmatmul.mubr.bf16.gmra.mrb[0].mxu0 %v2006
          %v2093 = vpop.f32.mrb[0].mxu0
          %v2094 = vadd.f32 0.0, %v2093
          %v2095 = vpop.f32.mrb[0].mxu0
          %v2096 = vpop.f32.mrb[0].mxu0
          %v2097 = vadd.f32 0.0, %v2096
          %v2098 = vpop.f32.mrb[0].mxu0
          %2099 = vmatprep.mubr.bf16.mxu0 0
          %2100 = vmatmul.mubr.bf16.gmra.mrb[0].mxu0 %v2009
          %v2101 = vpop.f32.mrb[0].mxu0
          %v2102 = vadd.f32 0.0, %v2101
          %v2103 = vpop.f32.mrb[0].mxu0
          %v2104 = vpop.f32.mrb[0].mxu0
          %v2105 = vadd.f32 0.0, %v2104
          %v2106 = vpop.f32.mrb[0].mxu0
          %2107 = vdwg.mxu0
          %2108 = vst [vmem:[#allocation3] sm:$0xff] %v2046
          %2109 = vst [vmem:[#allocation3 + $0x8] sm:$0xff] %v2049
          %2110 = vst [vmem:[#allocation3 + $0x10] sm:$0xff] %v2054
          %2111 = vst [vmem:[#allocation3 + $0x18] sm:$0xff] %v2057
          %2112 = vst [vmem:[#allocation3 + $0x20] sm:$0xff] %v2062
          %2113 = vst [vmem:[#allocation3 + $0x28] sm:$0xff] %v2065
          %2114 = vst [vmem:[#allocation3 + $0x30] sm:$0xff] %v2070
          %2115 = vst [vmem:[#allocation3 + $0x38] sm:$0xff] %v2073
          %2116 = vst [vmem:[#allocation3 + $0x40] sm:$0xff] %v2078
          %2117 = vst [vmem:[#allocation3 + $0x48] sm:$0xff] %v2081
          %2118 = vst [vmem:[#allocation3 + $0x50] sm:$0xff] %v2086
          %2119 = vst [vmem:[#allocation3 + $0x58] sm:$0xff] %v2089
          %2120 = vst [vmem:[#allocation3 + $0x60] sm:$0xff] %v2094
          %2121 = vst [vmem:[#allocation3 + $0x68] sm:$0xff] %v2097
          %2122 = vst [vmem:[#allocation3 + $0x70] sm:$0xff] %v2102
          %2123 = vst [vmem:[#allocation3 + $0x78] sm:$0xff] %v2105
        $region88: #{tpu_custom_call.1} parent=75 // pred_fallthru
          _
        // Predicated region
        $region89: #{tpu_custom_call.1} parent=75 // pred_check
          %p2124 = pneg %p365
        $region90: #{tpu_custom_call.1} parent=75 // pred_check_branch
          %2126 = sbr.rel (%p2124) target = $region92
        $region91: #{tpu_custom_call.1} parent=75 // pred_region
          %s2127 = smul.u32 16, %s30
          %s2129 = ssub.s32 2048, 2048
          %2130 = vsyncadd [#allocation4], %s2129
          %s2131 = smul.addr %s2127, 128
          %s2132 = scalar_lea.hbm %s14, %s2131
          %s2133 = sshll.u32 [#allocation3], 4
          %s2134 = int_to_ptr.vmem [resolvable:$true] %s2133
          %2139 = dma.vmem_to_hbm [thread:$0]  %s2134, 2048, %s2132, [#allocation4], 128, 128, 8
        $region92: #{tpu_custom_call.1} parent=75 // pred_fallthru
          _
        // Predicated region
        $region93: #{tpu_custom_call.1} parent=75 // pred_check
          %p2140 = pneg %p365
        $region94: #{tpu_custom_call.1} parent=75 // pred_check_branch
          %2142 = sbr.rel (%p2140) target = $region96
        $region95: #{tpu_custom_call.1} parent=75 // pred_region
          %2143 = dma.done [#allocation4], 2048
        $region96: #{tpu_custom_call.1} parent=75 // pred_fallthru
          _
      $region76: #{tpu_custom_call.1} parent=5 // pred_fallthru
        _
      %p2144 = scmp.le.s32.totalorder 2, %s21
      // Predicated region
      $region97: #{tpu_custom_call.1} parent=5 // pred_check
        %p2145 = pneg %p2144
      $region98: #{tpu_custom_call.1} parent=5 // pred_check_branch
        %2147 = sbr.rel (%p2145) target = $region100
      $region99: #{tpu_custom_call.1} parent=5 // pred_region
        %s2148 = ssub.s32 %s21, 2
      $region100: #{tpu_custom_call.1} parent=5 // pred_fallthru
        _
    $region6: #{tpu_custom_call.1} parent=1 // loop_footer
      %s25 = sadd.s32 1, %s21
    $region7: #{tpu_custom_call.1} parent=1 // loop_footer_branch
      %20 = sbr.rel target = $region3
    $region8: #{tpu_custom_call.1} parent=1 // loop_exit
      _
    %2149 = vsyncpa [#allocation4], 1
    %s2150 = scalar_lea.sflag [#allocation4], 1
    %2151 = vsyncpa %s2150, 1

</llo_original>
